<compile_context>
chip_gen: v6e
topology: v6e:2x2x1
jax: 0.10.0
libtpu: 0.0.40
codegen_flags: <defaults>
</compile_context>

<pallas_src>
import functools

import jax
import jax.numpy as jnp
from jax.experimental import pallas as pl
from jax.experimental.pallas import tpu as pltpu


# ----------------------------- Pallas kernels ------------------------------ #

def _prep_kernel(user_ref, origin_ref, tran_ref, loc_ref, inv_ref, acc_ref,
                 da_ref, df_ref, dp_ref, tim1_ref, tim_ref, t7_ref,
                 user1_ref, simemb_ref, w1_ref, b1_ref, w2_ref, b2_ref,
                 lhs_o, sim_o, norms_o, reg_o, *, rank, test_transition):
    R = rank

    # --- user normalize (torch F.normalize, dim=1) ---
    u = user_ref[...]
    nrm = jnp.sqrt(jnp.sum(u * u, axis=1, keepdims=True))
    un = u / jnp.maximum(nrm, 1e-12)

    def proj(e):                               # proj_user(ent, user)
        return e - un * jnp.sum(un * e, axis=1, keepdims=True)

    # --- diachronic time embedding ---
    delta = da_ref[...] * jnp.sin(df_ref[...] * t7_ref[...] + dp_ref[...])

    origin_p = proj(origin_ref[...])
    tran_p = proj(tran_ref[...])
    loc_p = proj(loc_ref[...])
    inv_p = proj(inv_ref[...])
    acc_p = proj(acc_ref[...])
    delta_p = proj(delta)
    tim1_p = proj(tim1_ref[...])
    tim_p = proj(tim_ref[...])

    sp = lambda e: (e[:, :R], e[:, R:])
    o0, o1 = sp(origin_p)
    t0, t1 = sp(tran_p)
    l0, l1 = sp(loc_p)
    i0, i1 = sp(inv_p)
    a0, a1 = sp(acc_p)
    d0, d1 = sp(delta_p)
    q0, q1 = sp(tim1_p)
    m0, m1 = sp(tim_p)
    u0, u1 = sp(un)

    # --- relation-path MLP, re/im rows stacked -> single matmul pair (f32) ---
    Bq = o0.shape[0]
    path = jnp.concatenate(
        [jnp.concatenate([a0, q0, d0, m0, i0], axis=1),
         jnp.concatenate([a1, q1, d1, m1, i1], axis=1)], axis=0)   # [2B, 5R]
    h = jnp.dot(path, w1_ref[...], preferred_element_type=jnp.float32) + b1_ref[...]
    h = jnp.maximum(h, 0.0)
    rp = jnp.dot(h, w2_ref[...], preferred_element_type=jnp.float32) + b2_ref[...]
    rp0 = rp[:Bq, :]
    rp1 = rp[Bq:, :]

    # --- complex products + fused score LHS:  score = LHS @ pois^T ---
    if test_transition:
        A = o0 * t0 - o1 * t1
        Bm = o0 * t1 + o1 * t0
    else:
        A = m0 * i0 - m1 * i1
        Bm = m0 * i1 + m1 * i0
    c = jnp.sum(A * u0 + Bm * u1, axis=1, keepdims=True)
    lhs = jnp.concatenate([A, Bm], axis=1) - c * un                # [B, 2R]

    A3 = o0 * rp0 - o1 * rp1
    B3 = o0 * rp1 + o1 * rp0
    c3 = jnp.sum(A3 * u0 + B3 * u1, axis=1, keepdims=True)
    lhs3 = jnp.concatenate([A3, B3], axis=1) - c3 * un             # [B, 2R]

    lhs_o[...] = jnp.concatenate([lhs, lhs3], axis=1)              # [B, 4R] lane-dense

    # --- similarity-branch LHS (normalize + complex product) ---
    u1v = user1_ref[...]
    n1 = jnp.sqrt(jnp.sum(u1v * u1v, axis=1, keepdims=True))
    u1n = u1v / jnp.maximum(n1, 1e-12)
    sv = simemb_ref[...]
    u1r, u1i = u1n[:, :R], u1n[:, R:]
    sr, si = sv[:, :R], sv[:, R:]
    sim_o[...] = jnp.concatenate([u1r * sr - u1i * si,
                                  u1i * sr + u1r * si], axis=1)    # [Bs, 2R]

    # --- norms slab (order: origin, tran, acc, inv, loc, delta, tim1, tim) ---
    norms_o[...] = jnp.concatenate(
        [jnp.sqrt(o0 ** 2 + o1 ** 2), jnp.sqrt(t0 ** 2 + t1 ** 2),
         jnp.sqrt(a0 ** 2 + a1 ** 2), jnp.sqrt(i0 ** 2 + i1 ** 2),
         jnp.sqrt(l0 ** 2 + l1 ** 2), jnp.sqrt(d0 ** 2 + d1 ** 2),
         jnp.sqrt(q0 ** 2 + q1 ** 2), jnp.sqrt(m0 ** 2 + m1 ** 2)], axis=1)  # [B, 8R]

    # --- regularizer: sum(sqrt(eng_re^2 + eng_im^2)) / 2 ---
    eng_re = rp0 - t0
    eng_im = rp1 - t1
    eng_mag = jnp.sqrt(eng_re ** 2 + eng_im ** 2)
    reg_o[...] = 0.5 * jnp.sum(jnp.sum(eng_mag, axis=1, keepdims=True),
                               axis=0, keepdims=True)              # [1, 1]


def prep_call(user, origin, tran, loc, inv, acc, da, df, dp, tim1, tim, t7,
              user1, simemb, W1, b1, W2, b2, *, rank, test_transition):
    B, D = user.shape                       # D = 2R
    Bs = user1.shape[0]
    R = rank
    fb = lambda shp: pl.BlockSpec(shp, lambda i: (0, 0))
    kern = functools.partial(_prep_kernel, rank=R, test_transition=test_transition)
    return pl.pallas_call(
        kern,
        grid=(1,),
        in_specs=([fb((B, D))] * 11
                  + [fb(t7.shape), fb(user1.shape), fb(simemb.shape),
                     fb(W1.shape), fb(b1.shape), fb(W2.shape), fb(b2.shape)]),
        out_specs=[fb((B, 4 * R)), fb((Bs, 2 * R)), fb((B, 8 * R)), fb((1, 1))],
        out_shape=[jax.ShapeDtypeStruct((B, 4 * R), jnp.float32),
                   jax.ShapeDtypeStruct((Bs, 2 * R), jnp.float32),
                   jax.ShapeDtypeStruct((B, 8 * R), jnp.float32),
                   jax.ShapeDtypeStruct((1, 1), jnp.float32)],
        compiler_params=pltpu.CompilerParams(vmem_limit_bytes=32 * 1024 * 1024),
    )(user, origin, tran, loc, inv, acc, da, df, dp, tim1, tim, t7,
      user1, simemb, W1, b1, W2, b2)


def _matmul_nt_kernel(lhs_ref, rhsT_ref, o_ref):
    # [M, K] @ [K, tile_n] -> [M, tile_n]; bf16 operands, f32 accumulation.
    o_ref[...] = jnp.dot(lhs_ref[...], rhsT_ref[...],
                         preferred_element_type=jnp.float32)


def matmul_nt_call(lhs, rhs_T, *, tile_n=512):
    """Compute lhs @ rhs_T, tiling the candidate (lane) axis of rhs_T."""
    M, K = lhs.shape
    K2, N = rhs_T.shape
    assert K == K2
    n128 = ((N + 127) // 128) * 128
    tile_n = min(tile_n, n128)
    n_pad = ((N + tile_n - 1) // tile_n) * tile_n     # pl.cdiv-style padding
    if n_pad != N:
        rhs_T = jnp.pad(rhs_T, ((0, 0), (0, n_pad - N)))
    lhs_b = lhs.astype(jnp.bfloat16)
    rhs_b = rhs_T.astype(jnp.bfloat16)
    out = pl.pallas_call(
        _matmul_nt_kernel,
        grid=(n_pad // tile_n,),
        in_specs=[pl.BlockSpec((M, K), lambda j: (0, 0)),
                  pl.BlockSpec((K, tile_n), lambda j: (0, j))],
        out_specs=pl.BlockSpec((M, tile_n), lambda j: (0, j)),
        out_shape=jax.ShapeDtypeStruct((M, n_pad), jnp.float32),
        compiler_params=pltpu.CompilerParams(
            dimension_semantics=("parallel",),
            vmem_limit_bytes=32 * 1024 * 1024),
    )(lhs_b, rhs_b)
    return out[:, :N]


# ------------------------------- model glue -------------------------------- #

def make_params(key, sizes, rank, init_size=1e-3):
    vocab = [sizes[2], sizes[6], sizes[2], sizes[5], sizes[3], sizes[4],
             sizes[4], sizes[4], sizes[1], sizes[1], sizes[0], sizes[7]]
    keys = jax.random.split(key, len(vocab) + 4)
    emb = [jax.random.normal(keys[i], (v, 2 * rank), jnp.float32) * init_size
           for i, v in enumerate(vocab)]
    W1 = jax.random.normal(keys[12], (5 * rank, 200), jnp.float32) * 0.05
    b1 = jax.random.normal(keys[13], (1, 200), jnp.float32) * 0.05
    W2 = jax.random.normal(keys[14], (200, rank), jnp.float32) * 0.05
    b2 = jax.random.normal(keys[15], (1, rank), jnp.float32) * 0.05
    # TODO(synk): nn.BatchNorm1d(sizes[2]) is declared in __init__ but never used in forward.
    return {"emb": emb, "W1": W1, "b1": b1, "W2": W2, "b2": b2}


def forward(params, x, similar, rank, test_transition=True):
    emb = params["emb"]
    R = rank
    B = x.shape[0]

    # embedding gathers (glue)
    origin = emb[0][x[:, 6]]
    tran = emb[1][x[:, 8]]
    loc = emb[2][x[:, 3]]
    inv = emb[3][x[:, 5]]
    acc = emb[4][x[:, 2]]
    da = emb[5][x[:, 7]]
    df = emb[6][x[:, 7]]
    dp = emb[7][x[:, 7]]
    tim1 = emb[8][x[:, 4]]
    tim = emb[9][x[:, 1]]
    user = emb[10][x[:, 0]]
    t7 = x[:, 7].astype(jnp.float32).reshape(-1, 1)
    user1 = emb[10][similar[:, 0]]
    simemb = emb[11][similar[:, 1]]

    lhs_slab, sim_lhs, norms_slab, reg = prep_call(
        user, origin, tran, loc, inv, acc, da, df, dp, tim1, tim, t7,
        user1, simemb, params["W1"], params["b1"], params["W2"], params["b2"],
        rank=R, test_transition=test_transition)

    # candidate tables, pre-transposed once (static embedding tables)
    pois_T = emb[2].T                                   # [2R, Np]
    users_T = emb[10].T                                 # [2R, Nu]

    # single matmul for BOTH score and score3 (rows interleaved)
    stacked = lhs_slab.reshape(B, 2, 2 * R).reshape(2 * B, 2 * R)
    both = matmul_nt_call(stacked, pois_T)              # [2B, Np]
    both = both.reshape(B, 2, -1)
    score = both[:, 0, :]
    score3 = both[:, 1, :]

    sim_score = matmul_nt_call(sim_lhs, users_T)        # [Bs, Nu]

    norms = tuple(norms_slab[:, k * R:(k + 1) * R] for k in range(8))
    return score, sim_score, score3, norms, reg[0, 0]


# ------------------------- pure-JAX reference check ------------------------ #

def reference_forward(params, x, similar, rank, test_transition=True):
    emb = params["emb"]
    W1, b1, W2, b2 = params["W1"], params["b1"], params["W2"], params["b2"]
    R = rank
    normalize = lambda v: v / jnp.maximum(jnp.linalg.norm(v, axis=1, keepdims=True), 1e-12)
    proj_user = lambda e, u: e - u * jnp.sum(u * e, axis=1, keepdims=True)

    def proj_users(pois, u):
        tmp = u @ pois.T
        return pois[None, :, :] - tmp[:, :, None] * u[:, None, :]

    origin = emb[0][x[:, 6]]; tran = emb[1][x[:, 8]]; loc = emb[2][x[:, 3]]
    inv = emb[3][x[:, 5]]; acc = emb[4][x[:, 2]]
    tim1 = emb[8][x[:, 4]]; tim = emb[9][x[:, 1]]
    t7 = x[:, 7].astype(jnp.float32).reshape(-1, 1)
    delta = emb[5][x[:, 7]] * jnp.sin(emb[6][x[:, 7]] * t7 + emb[7][x[:, 7]])
    user = normalize(emb[10][x[:, 0]])
    origin, tran, loc, inv, acc, delta, tim1, tim = (
        proj_user(e, user) for e in (origin, tran, loc, inv, acc, delta, tim1, tim))
    right = proj_users(emb[2], user)
    split = lambda e: (e[..., :R], e[..., R:])
    o0, o1 = split(origin); t0, t1 = split(tran); l0, l1 = split(loc)
    i0, i1 = split(inv); a0, a1 = split(acc); d0, d1 = split(delta)
    q0, q1 = split(tim1); m0, m1 = split(tim); r0, r1 = split(right)

    mlp = lambda z: jnp.maximum(z @ W1 + b1, 0.0) @ W2 + b2
    rp0 = mlp(jnp.concatenate([a0, q0, d0, m0, i0], 1))
    rp1 = mlp(jnp.concatenate([a1, q1, d1, m1, i1], 1))

    bscore = lambda A, B: (jnp.einsum('br,bpr->bp', A, r0) + jnp.einsum('br,bpr->bp', B, r1))
    if test_transition:
        score = bscore(o0 * t0 - o1 * t1, o0 * t1 + o1 * t0)
    else:
        score = bscore(m0 * i0 - m1 * i1, m0 * i1 + m1 * i0)
    score3 = bscore(o0 * rp0 - o1 * rp1, o0 * rp1 + o1 * rp0)

    user1 = normalize(emb[10][similar[:, 0]]); sim = emb[11][similar[:, 1]]
    u1r, u1i = split(user1); sr, si = split(sim); rs0, rs1 = split(emb[10])
    sim_score = (u1r * sr - u1i * si) @ rs0.T + (u1i * sr + u1r * si) @ rs1.T

    norms = (jnp.sqrt(o0 ** 2 + o1 ** 2), jnp.sqrt(t0 ** 2 + t1 ** 2),
             jnp.sqrt(a0 ** 2 + a1 ** 2), jnp.sqrt(i0 ** 2 + i1 ** 2),
             jnp.sqrt(l0 ** 2 + l1 ** 2), jnp.sqrt(d0 ** 2 + d1 ** 2),
             jnp.sqrt(q0 ** 2 + q1 ** 2), jnp.sqrt(m0 ** 2 + m1 ** 2))
    reg = jnp.sum(jnp.sqrt((rp0 - t0) ** 2 + (rp1 - t1) ** 2)) / 2.0
    return score, sim_score, score3, norms, reg


# ----------------------------------- main ----------------------------------- #

if __name__ == "__main__":
    # sizes = (n_users, n_times, n_pois, n_acc, n_delta, n_inv, n_tran, n_sim)
    sizes = (16, 12, 256, 10, 14, 9, 11, 13)
    rank = 32
    B = 8

    key = jax.random.PRNGKey(0)
    pkey, xkey, skey = jax.random.split(key, 3)
    params = make_params(pkey, sizes, rank)

    col_max = [sizes[0], sizes[1], sizes[3], sizes[2], sizes[1],
               sizes[5], sizes[2], sizes[4], sizes[6]]
    xcols = [jax.random.randint(jax.random.fold_in(xkey, c), (B, 1), 0, m, jnp.int32)
             for c, m in enumerate(col_max)]
    x = jnp.concatenate(xcols, axis=1)                        # [B, 9]
    similar = jnp.concatenate(
        [jax.random.randint(jax.random.fold_in(skey, 0), (B, 1), 0, sizes[0], jnp.int32),
         jax.random.randint(jax.random.fold_in(skey, 1), (B, 1), 0, sizes[7], jnp.int32)],
        axis=1)                                               # [B, 2]

    score, sim_score, score3, norms, reg = jax.jit(
        forward, static_argnums=(3, 4))(params, x, similar, rank, True)
    jax.block_until_ready((score, sim_score, score3, norms, reg))

    # sanity-check against a pure-JAX f32 reference of the torch semantics
    ref_score, ref_sim, ref_score3, ref_norms, ref_reg = reference_forward(
        params, x, similar, rank, True)
    assert score.shape == (B, sizes[2]) and score3.shape == (B, sizes[2])
    assert sim_score.shape == (B, sizes[0])

    def rel_err(a, b):
        return float(jnp.max(jnp.abs(a - b)) / (jnp.max(jnp.abs(b)) + 1e-30))

    # score paths use bf16 MXU operands (f32 accumulation): scale-relative check
    assert rel_err(score, ref_score) < 5e-2
    assert rel_err(score3, ref_score3) < 5e-2
    assert rel_err(sim_score, ref_sim) < 5e-2
    # prep-side outputs are pure f32: tight check
    for n, rn in zip(norms, ref_norms):
        assert jnp.allclose(n, rn, rtol=1e-4, atol=1e-9)
    assert rel_err(jnp.reshape(reg, (1,)), jnp.reshape(ref_reg, (1,))) < 1e-4
    assert all(jnp.all(jnp.isfinite(n)) for n in norms) and jnp.isfinite(reg)

    print("KERNEL_OK")
</pallas_src>

<mosaic_0001>
module attributes {stable_mosaic.version = 11 : i64} {
  func.func @_matmul_nt_kernel(%arg0: i32, %arg1: memref<16x64xbf16, #tpu.memory_space<vmem>>, %arg2: memref<64x256xbf16, #tpu.memory_space<vmem>>, %arg3: memref<16x256xf32, #tpu.memory_space<vmem>>) attributes {dimension_semantics = [#tpu.dimension_semantics<parallel>], iteration_bounds = array<i64: 1>, scalar_prefetch = 0 : i64, scratch_operands = 0 : i64, tpu.core_type = #tpu.core_type<tc>, window_params = [{pipeline_mode = #tpu.pipeline_mode<synchronous>, transform_indices = @transform_0, window_bounds = array<i64: 16, 64>}, {transform_indices = @transform_1, window_bounds = array<i64: 64, 256>}, {transform_indices = @transform_2, window_bounds = array<i64: 16, 256>}]} {
    %c0 = arith.constant 0 : index
    %c0_0 = arith.constant 0 : index
    %0 = vector.load %arg1[%c0, %c0_0] : memref<16x64xbf16, #tpu.memory_space<vmem>>, vector<16x64xbf16>
    %c0_1 = arith.constant 0 : index
    %c0_2 = arith.constant 0 : index
    %1 = vector.load %arg2[%c0_1, %c0_2] : memref<64x256xbf16, #tpu.memory_space<vmem>>, vector<64x256xbf16>
    %cst = arith.constant dense<0.000000e+00> : vector<16x256xf32>
    %2 = tpu.matmul %0, %1, %cst {dimension_numbers = #tpu.dot_dimension_numbers<[1], [0], [0], [1], [0, 0, 1, 1], [], []>} : vector<16x64xbf16>, vector<64x256xbf16>, vector<16x256xf32> -> vector<16x256xf32>
    %c0_3 = arith.constant 0 : index
    %c0_4 = arith.constant 0 : index
    %3 = vector.load %arg3[%c0_3, %c0_4] : memref<16x256xf32, #tpu.memory_space<vmem>>, vector<16x256xf32>
    tpu.vector_store %arg3[%c0_3, %c0_4], %2 {strides = array<i32>} : memref<16x256xf32, #tpu.memory_space<vmem>>, vector<16x256xf32>,
    return
  }
  func.func @transform_0(%arg0: i32) -> (i32, i32) {
    %c0_i32 = arith.constant 0 : i32
    %c0_i32_0 = arith.constant 0 : i32
    %c0_i32_1 = arith.constant 0 : i32
    return %c0_i32, %c0_i32_0 : i32, i32
  }
  func.func @transform_1(%arg0: i32) -> (i32, i32) {
    %c0_i32 = arith.constant 0 : i32
    %c0_i32_0 = arith.constant 0 : i32
    return %c0_i32, %arg0 : i32, i32
  }
  func.func @transform_2(%arg0: i32) -> (i32, i32) {
    %c0_i32 = arith.constant 0 : i32
    %c0_i32_0 = arith.constant 0 : i32
    return %c0_i32, %arg0 : i32, i32
  }
}

module attributes {stable_mosaic.version = 11 : i64} {
  func.func @_prep_kernel(%arg0: i32, %arg1: memref<8x64xf32, #tpu.memory_space<vmem>>, %arg2: memref<8x64xf32, #tpu.memory_space<vmem>>, %arg3: memref<8x64xf32, #tpu.memory_space<vmem>>, %arg4: memref<8x64xf32, #tpu.memory_space<vmem>>, %arg5: memref<8x64xf32, #tpu.memory_space<vmem>>, %arg6: memref<8x64xf32, #tpu.memory_space<vmem>>, %arg7: memref<8x64xf32, #tpu.memory_space<vmem>>, %arg8: memref<8x64xf32, #tpu.memory_space<vmem>>, %arg9: memref<8x64xf32, #tpu.memory_space<vmem>>, %arg10: memref<8x64xf32, #tpu.memory_space<vmem>>, %arg11: memref<8x64xf32, #tpu.memory_space<vmem>>, %arg12: memref<8x1xf32, #tpu.memory_space<vmem>>, %arg13: memref<8x64xf32, #tpu.memory_space<vmem>>, %arg14: memref<8x64xf32, #tpu.memory_space<vmem>>, %arg15: memref<160x200xf32, #tpu.memory_space<vmem>>, %arg16: memref<1x200xf32, #tpu.memory_space<vmem>>, %arg17: memref<200x32xf32, #tpu.memory_space<vmem>>, %arg18: memref<1x32xf32, #tpu.memory_space<vmem>>, %arg19: memref<8x128xf32, #tpu.memory_space<vmem>>, %arg20: memref<8x64xf32, #tpu.memory_space<vmem>>, %arg21: memref<8x256xf32, #tpu.memory_space<vmem>>, %arg22: memref<1x1xf32, #tpu.memory_space<vmem>>) attributes {dimension_semantics = [#tpu.dimension_semantics<arbitrary>], iteration_bounds = array<i64: 1>, scalar_prefetch = 0 : i64, scratch_operands = 0 : i64, tpu.core_type = #tpu.core_type<tc>, window_params = [{pipeline_mode = #tpu.pipeline_mode<synchronous>, transform_indices = @transform_0, window_bounds = array<i64: 8, 64>}, {pipeline_mode = #tpu.pipeline_mode<synchronous>, transform_indices = @transform_1, window_bounds = array<i64: 8, 64>}, {pipeline_mode = #tpu.pipeline_mode<synchronous>, transform_indices = @transform_2, window_bounds = array<i64: 8, 64>}, {pipeline_mode = #tpu.pipeline_mode<synchronous>, transform_indices = @transform_3, window_bounds = array<i64: 8, 64>}, {pipeline_mode = #tpu.pipeline_mode<synchronous>, transform_indices = @transform_4, window_bounds = array<i64: 8, 64>}, {pipeline_mode = #tpu.pipeline_mode<synchronous>, transform_indices = @transform_5, window_bounds = array<i64: 8, 64>}, {pipeline_mode = #tpu.pipeline_mode<synchronous>, transform_indices = @transform_6, window_bounds = array<i64: 8, 64>}, {pipeline_mode = #tpu.pipeline_mode<synchronous>, transform_indices = @transform_7, window_bounds = array<i64: 8, 64>}, {pipeline_mode = #tpu.pipeline_mode<synchronous>, transform_indices = @transform_8, window_bounds = array<i64: 8, 64>}, {pipeline_mode = #tpu.pipeline_mode<synchronous>, transform_indices = @transform_9, window_bounds = array<i64: 8, 64>}, {pipeline_mode = #tpu.pipeline_mode<synchronous>, transform_indices = @transform_10, window_bounds = array<i64: 8, 64>}, {pipeline_mode = #tpu.pipeline_mode<synchronous>, transform_indices = @transform_11, window_bounds = array<i64: 8, 1>}, {pipeline_mode = #tpu.pipeline_mode<synchronous>, transform_indices = @transform_12, window_bounds = array<i64: 8, 64>}, {pipeline_mode = #tpu.pipeline_mode<synchronous>, transform_indices = @transform_13, window_bounds = array<i64: 8, 64>}, {pipeline_mode = #tpu.pipeline_mode<synchronous>, transform_indices = @transform_14, window_bounds = array<i64: 160, 200>}, {pipeline_mode = #tpu.pipeline_mode<synchronous>, transform_indices = @transform_15, window_bounds = array<i64: 1, 200>}, {pipeline_mode = #tpu.pipeline_mode<synchronous>, transform_indices = @transform_16, window_bounds = array<i64: 200, 32>}, {pipeline_mode = #tpu.pipeline_mode<synchronous>, transform_indices = @transform_17, window_bounds = array<i64: 1, 32>}, {pipeline_mode = #tpu.pipeline_mode<synchronous>, transform_indices = @transform_18, window_bounds = array<i64: 8, 128>}, {pipeline_mode = #tpu.pipeline_mode<synchronous>, transform_indices = @transform_19, window_bounds = array<i64: 8, 64>}, {pipeline_mode = #tpu.pipeline_mode<synchronous>, transform_indices = @transform_20, window_bounds = array<i64: 8, 256>}, {pipeline_mode = #tpu.pipeline_mode<synchronous>, transform_indices = @transform_21, window_bounds = array<i64: 1, 1>}]} {
    %c0 = arith.constant 0 : index
    %c0_0 = arith.constant 0 : index
    %0 = vector.load %arg1[%c0, %c0_0] : memref<8x64xf32, #tpu.memory_space<vmem>>, vector<8x64xf32>
    %1 = arith.mulf %0, %0 : vector<8x64xf32>
    %cst = arith.constant dense<0.000000e+00> : vector<8xf32>
    %2 = vector.multi_reduction <add>, %1, %cst [1] : vector<8x64xf32> to vector<8xf32>
    %3 = vector.shape_cast %2 : vector<8xf32> to vector<8x1xf32>
    %4 = math.sqrt %3 : vector<8x1xf32>
    %cst_1 = arith.constant 9.99999996E-13 : f32
    %5 = vector.broadcast %cst_1 : f32 to vector<8x1xf32>
    %6 = arith.maximumf %4, %5 : vector<8x1xf32>
    %7 = vector.broadcast %6 : vector<8x1xf32> to vector<8x64xf32>
    %8 = arith.divf %0, %7 : vector<8x64xf32>
    %c0_2 = arith.constant 0 : index
    %c0_3 = arith.constant 0 : index
    %9 = vector.load %arg7[%c0_2, %c0_3] : memref<8x64xf32, #tpu.memory_space<vmem>>, vector<8x64xf32>
    %c0_4 = arith.constant 0 : index
    %c0_5 = arith.constant 0 : index
    %10 = vector.load %arg8[%c0_4, %c0_5] : memref<8x64xf32, #tpu.memory_space<vmem>>, vector<8x64xf32>
    %c0_6 = arith.constant 0 : index
    %c0_7 = arith.constant 0 : index
    %11 = vector.load %arg12[%c0_6, %c0_7] : memref<8x1xf32, #tpu.memory_space<vmem>>, vector<8x1xf32>
    %12 = vector.broadcast %11 : vector<8x1xf32> to vector<8x64xf32>
    %13 = arith.mulf %10, %12 : vector<8x64xf32>
    %c0_8 = arith.constant 0 : index
    %c0_9 = arith.constant 0 : index
    %14 = vector.load %arg9[%c0_8, %c0_9] : memref<8x64xf32, #tpu.memory_space<vmem>>, vector<8x64xf32>
    %15 = arith.addf %13, %14 : vector<8x64xf32>
    %16 = math.sin %15 : vector<8x64xf32>
    %17 = arith.mulf %9, %16 : vector<8x64xf32>
    %c0_10 = arith.constant 0 : index
    %c0_11 = arith.constant 0 : index
    %18 = vector.load %arg2[%c0_10, %c0_11] : memref<8x64xf32, #tpu.memory_space<vmem>>, vector<8x64xf32>
    %19 = arith.mulf %8, %18 : vector<8x64xf32>
    %cst_12 = arith.constant dense<0.000000e+00> : vector<8xf32>
    %20 = vector.multi_reduction <add>, %19, %cst_12 [1] : vector<8x64xf32> to vector<8xf32>
    %21 = vector.shape_cast %20 : vector<8xf32> to vector<8x1xf32>
    %22 = vector.broadcast %21 : vector<8x1xf32> to vector<8x64xf32>
    %23 = arith.mulf %8, %22 : vector<8x64xf32>
    %24 = arith.subf %18, %23 : vector<8x64xf32>
    %c0_13 = arith.constant 0 : index
    %c0_14 = arith.constant 0 : index
    %25 = vector.load %arg3[%c0_13, %c0_14] : memref<8x64xf32, #tpu.memory_space<vmem>>, vector<8x64xf32>
    %26 = arith.mulf %8, %25 : vector<8x64xf32>
    %cst_15 = arith.constant dense<0.000000e+00> : vector<8xf32>
    %27 = vector.multi_reduction <add>, %26, %cst_15 [1] : vector<8x64xf32> to vector<8xf32>
    %28 = vector.shape_cast %27 : vector<8xf32> to vector<8x1xf32>
    %29 = vector.broadcast %28 : vector<8x1xf32> to vector<8x64xf32>
    %30 = arith.mulf %8, %29 : vector<8x64xf32>
    %31 = arith.subf %25, %30 : vector<8x64xf32>
    %c0_16 = arith.constant 0 : index
    %c0_17 = arith.constant 0 : index
    %32 = vector.load %arg4[%c0_16, %c0_17] : memref<8x64xf32, #tpu.memory_space<vmem>>, vector<8x64xf32>
    %33 = arith.mulf %8, %32 : vector<8x64xf32>
    %cst_18 = arith.constant dense<0.000000e+00> : vector<8xf32>
    %34 = vector.multi_reduction <add>, %33, %cst_18 [1] : vector<8x64xf32> to vector<8xf32>
    %35 = vector.shape_cast %34 : vector<8xf32> to vector<8x1xf32>
    %36 = vector.broadcast %35 : vector<8x1xf32> to vector<8x64xf32>
    %37 = arith.mulf %8, %36 : vector<8x64xf32>
    %38 = arith.subf %32, %37 : vector<8x64xf32>
    %c0_19 = arith.constant 0 : index
    %c0_20 = arith.constant 0 : index
    %39 = vector.load %arg5[%c0_19, %c0_20] : memref<8x64xf32, #tpu.memory_space<vmem>>, vector<8x64xf32>
    %40 = arith.mulf %8, %39 : vector<8x64xf32>
    %cst_21 = arith.constant dense<0.000000e+00> : vector<8xf32>
    %41 = vector.multi_reduction <add>, %40, %cst_21 [1] : vector<8x64xf32> to vector<8xf32>
    %42 = vector.shape_cast %41 : vector<8xf32> to vector<8x1xf32>
    %43 = vector.broadcast %42 : vector<8x1xf32> to vector<8x64xf32>
    %44 = arith.mulf %8, %43 : vector<8x64xf32>
    %45 = arith.subf %39, %44 : vector<8x64xf32>
    %c0_22 = arith.constant 0 : index
    %c0_23 = arith.constant 0 : index
    %46 = vector.load %arg6[%c0_22, %c0_23] : memref<8x64xf32, #tpu.memory_space<vmem>>, vector<8x64xf32>
    %47 = arith.mulf %8, %46 : vector<8x64xf32>
    %cst_24 = arith.constant dense<0.000000e+00> : vector<8xf32>
    %48 = vector.multi_reduction <add>, %47, %cst_24 [1] : vector<8x64xf32> to vector<8xf32>
    %49 = vector.shape_cast %48 : vector<8xf32> to vector<8x1xf32>
    %50 = vector.broadcast %49 : vector<8x1xf32> to vector<8x64xf32>
    %51 = arith.mulf %8, %50 : vector<8x64xf32>
    %52 = arith.subf %46, %51 : vector<8x64xf32>
    %53 = arith.mulf %8, %17 : vector<8x64xf32>
    %cst_25 = arith.constant dense<0.000000e+00> : vector<8xf32>
    %54 = vector.multi_reduction <add>, %53, %cst_25 [1] : vector<8x64xf32> to vector<8xf32>
    %55 = vector.shape_cast %54 : vector<8xf32> to vector<8x1xf32>
    %56 = vector.broadcast %55 : vector<8x1xf32> to vector<8x64xf32>
    %57 = arith.mulf %8, %56 : vector<8x64xf32>
    %58 = arith.subf %17, %57 : vector<8x64xf32>
    %c0_26 = arith.constant 0 : index
    %c0_27 = arith.constant 0 : index
    %59 = vector.load %arg10[%c0_26, %c0_27] : memref<8x64xf32, #tpu.memory_space<vmem>>, vector<8x64xf32>
    %60 = arith.mulf %8, %59 : vector<8x64xf32>
    %cst_28 = arith.constant dense<0.000000e+00> : vector<8xf32>
    %61 = vector.multi_reduction <add>, %60, %cst_28 [1] : vector<8x64xf32> to vector<8xf32>
    %62 = vector.shape_cast %61 : vector<8xf32> to vector<8x1xf32>
    %63 = vector.broadcast %62 : vector<8x1xf32> to vector<8x64xf32>
    %64 = arith.mulf %8, %63 : vector<8x64xf32>
    %65 = arith.subf %59, %64 : vector<8x64xf32>
    %c0_29 = arith.constant 0 : index
    %c0_30 = arith.constant 0 : index
    %66 = vector.load %arg11[%c0_29, %c0_30] : memref<8x64xf32, #tpu.memory_space<vmem>>, vector<8x64xf32>
    %67 = arith.mulf %8, %66 : vector<8x64xf32>
    %cst_31 = arith.constant dense<0.000000e+00> : vector<8xf32>
    %68 = vector.multi_reduction <add>, %67, %cst_31 [1] : vector<8x64xf32> to vector<8xf32>
    %69 = vector.shape_cast %68 : vector<8xf32> to vector<8x1xf32>
    %70 = vector.broadcast %69 : vector<8x1xf32> to vector<8x64xf32>
    %71 = arith.mulf %8, %70 : vector<8x64xf32>
    %72 = arith.subf %66, %71 : vector<8x64xf32>
    %73 = vector.extract_strided_slice %24 {offsets = [0, 0], sizes = [8, 32], strides = [1, 1]} : vector<8x64xf32> to vector<8x32xf32>
    %74 = vector.extract_strided_slice %24 {offsets = [0, 32], sizes = [8, 32], strides = [1, 1]} : vector<8x64xf32> to vector<8x32xf32>
    %75 = vector.extract_strided_slice %31 {offsets = [0, 0], sizes = [8, 32], strides = [1, 1]} : vector<8x64xf32> to vector<8x32xf32>
    %76 = vector.extract_strided_slice %31 {offsets = [0, 32], sizes = [8, 32], strides = [1, 1]} : vector<8x64xf32> to vector<8x32xf32>
    %77 = vector.extract_strided_slice %38 {offsets = [0, 0], sizes = [8, 32], strides = [1, 1]} : vector<8x64xf32> to vector<8x32xf32>
    %78 = vector.extract_strided_slice %38 {offsets = [0, 32], sizes = [8, 32], strides = [1, 1]} : vector<8x64xf32> to vector<8x32xf32>
    %79 = vector.extract_strided_slice %45 {offsets = [0, 0], sizes = [8, 32], strides = [1, 1]} : vector<8x64xf32> to vector<8x32xf32>
    %80 = vector.extract_strided_slice %45 {offsets = [0, 32], sizes = [8, 32], strides = [1, 1]} : vector<8x64xf32> to vector<8x32xf32>
    %81 = vector.extract_strided_slice %52 {offsets = [0, 0], sizes = [8, 32], strides = [1, 1]} : vector<8x64xf32> to vector<8x32xf32>
    %82 = vector.extract_strided_slice %52 {offsets = [0, 32], sizes = [8, 32], strides = [1, 1]} : vector<8x64xf32> to vector<8x32xf32>
    %83 = vector.extract_strided_slice %58 {offsets = [0, 0], sizes = [8, 32], strides = [1, 1]} : vector<8x64xf32> to vector<8x32xf32>
    %84 = vector.extract_strided_slice %58 {offsets = [0, 32], sizes = [8, 32], strides = [1, 1]} : vector<8x64xf32> to vector<8x32xf32>
    %85 = vector.extract_strided_slice %65 {offsets = [0, 0], sizes = [8, 32], strides = [1, 1]} : vector<8x64xf32> to vector<8x32xf32>
    %86 = vector.extract_strided_slice %65 {offsets = [0, 32], sizes = [8, 32], strides = [1, 1]} : vector<8x64xf32> to vector<8x32xf32>
    %87 = vector.extract_strided_slice %72 {offsets = [0, 0], sizes = [8, 32], strides = [1, 1]} : vector<8x64xf32> to vector<8x32xf32>
    %88 = vector.extract_strided_slice %72 {offsets = [0, 32], sizes = [8, 32], strides = [1, 1]} : vector<8x64xf32> to vector<8x32xf32>
    %89 = vector.extract_strided_slice %8 {offsets = [0, 0], sizes = [8, 32], strides = [1, 1]} : vector<8x64xf32> to vector<8x32xf32>
    %90 = vector.extract_strided_slice %8 {offsets = [0, 32], sizes = [8, 32], strides = [1, 1]} : vector<8x64xf32> to vector<8x32xf32>
    %91 = tpu.concatenate %81, %85, %83, %87, %79 in 1 : vector<8x32xf32>, vector<8x32xf32>, vector<8x32xf32>, vector<8x32xf32>, vector<8x32xf32> -> vector<8x160xf32>
    %92 = tpu.concatenate %82, %86, %84, %88, %80 in 1 : vector<8x32xf32>, vector<8x32xf32>, vector<8x32xf32>, vector<8x32xf32>, vector<8x32xf32> -> vector<8x160xf32>
    %93 = tpu.concatenate %91, %92 in 0 : vector<8x160xf32>, vector<8x160xf32> -> vector<16x160xf32>
    %c0_32 = arith.constant 0 : index
    %c0_33 = arith.constant 0 : index
    %94 = vector.load %arg15[%c0_32, %c0_33] : memref<160x200xf32, #tpu.memory_space<vmem>>, vector<160x200xf32>
    %cst_34 = arith.constant dense<0.000000e+00> : vector<16x200xf32>
    %95 = tpu.matmul %93, %94, %cst_34 {dimension_numbers = #tpu.dot_dimension_numbers<[1], [0], [0], [1], [0, 0, 1, 1], [], []>} : vector<16x160xf32>, vector<160x200xf32>, vector<16x200xf32> -> vector<16x200xf32>
    %c0_35 = arith.constant 0 : index
    %c0_36 = arith.constant 0 : index
    %96 = vector.load %arg16[%c0_35, %c0_36] : memref<1x200xf32, #tpu.memory_space<vmem>>, vector<1x200xf32>
    %97 = vector.broadcast %96 : vector<1x200xf32> to vector<16x200xf32>
    %98 = arith.addf %95, %97 : vector<16x200xf32>
    %cst_37 = arith.constant 0.000000e+00 : f32
    %99 = vector.broadcast %cst_37 : f32 to vector<16x200xf32>
    %100 = arith.maximumf %98, %99 : vector<16x200xf32>
    %c0_38 = arith.constant 0 : index
    %c0_39 = arith.constant 0 : index
    %101 = vector.load %arg17[%c0_38, %c0_39] : memref<200x32xf32, #tpu.memory_space<vmem>>, vector<200x32xf32>
    %cst_40 = arith.constant dense<0.000000e+00> : vector<16x32xf32>
    %102 = tpu.matmul %100, %101, %cst_40 {dimension_numbers = #tpu.dot_dimension_numbers<[1], [0], [0], [1], [0, 0, 1, 1], [], []>} : vector<16x200xf32>, vector<200x32xf32>, vector<16x32xf32> -> vector<16x32xf32>
    %c0_41 = arith.constant 0 : index
    %c0_42 = arith.constant 0 : index
    %103 = vector.load %arg18[%c0_41, %c0_42] : memref<1x32xf32, #tpu.memory_space<vmem>>, vector<1x32xf32>
    %104 = vector.broadcast %103 : vector<1x32xf32> to vector<16x32xf32>
    %105 = arith.addf %102, %104 : vector<16x32xf32>
    %106 = vector.extract_strided_slice %105 {offsets = [0, 0], sizes = [8, 32], strides = [1, 1]} : vector<16x32xf32> to vector<8x32xf32>
    %107 = vector.extract_strided_slice %105 {offsets = [8, 0], sizes = [8, 32], strides = [1, 1]} : vector<16x32xf32> to vector<8x32xf32>
    %108 = arith.mulf %73, %75 : vector<8x32xf32>
    %109 = arith.mulf %74, %76 : vector<8x32xf32>
    %110 = arith.subf %108, %109 : vector<8x32xf32>
    %111 = arith.mulf %73, %76 : vector<8x32xf32>
    %112 = arith.mulf %74, %75 : vector<8x32xf32>
    %113 = arith.addf %111, %112 : vector<8x32xf32>
    %114 = arith.mulf %110, %89 : vector<8x32xf32>
    %115 = arith.mulf %113, %90 : vector<8x32xf32>
    %116 = arith.addf %114, %115 : vector<8x32xf32>
    %cst_43 = arith.constant dense<0.000000e+00> : vector<8xf32>
    %117 = vector.multi_reduction <add>, %116, %cst_43 [1] : vector<8x32xf32> to vector<8xf32>
    %118 = vector.shape_cast %117 : vector<8xf32> to vector<8x1xf32>
    %119 = tpu.concatenate %110, %113 in 1 : vector<8x32xf32>, vector<8x32xf32> -> vector<8x64xf32>
    %120 = vector.broadcast %118 : vector<8x1xf32> to vector<8x64xf32>
    %121 = arith.mulf %120, %8 : vector<8x64xf32>
    %122 = arith.subf %119, %121 : vector<8x64xf32>
    %123 = arith.mulf %73, %106 : vector<8x32xf32>
    %124 = arith.mulf %74, %107 : vector<8x32xf32>
    %125 = arith.subf %123, %124 : vector<8x32xf32>
    %126 = arith.mulf %73, %107 : vector<8x32xf32>
    %127 = arith.mulf %74, %106 : vector<8x32xf32>
    %128 = arith.addf %126, %127 : vector<8x32xf32>
    %129 = arith.mulf %125, %89 : vector<8x32xf32>
    %130 = arith.mulf %128, %90 : vector<8x32xf32>
    %131 = arith.addf %129, %130 : vector<8x32xf32>
    %cst_44 = arith.constant dense<0.000000e+00> : vector<8xf32>
    %132 = vector.multi_reduction <add>, %131, %cst_44 [1] : vector<8x32xf32> to vector<8xf32>
    %133 = vector.shape_cast %132 : vector<8xf32> to vector<8x1xf32>
    %134 = tpu.concatenate %125, %128 in 1 : vector<8x32xf32>, vector<8x32xf32> -> vector<8x64xf32>
    %135 = vector.broadcast %133 : vector<8x1xf32> to vector<8x64xf32>
    %136 = arith.mulf %135, %8 : vector<8x64xf32>
    %137 = arith.subf %134, %136 : vector<8x64xf32>
    %138 = tpu.concatenate %122, %137 in 1 : vector<8x64xf32>, vector<8x64xf32> -> vector<8x128xf32>
    %c0_45 = arith.constant 0 : index
    %c0_46 = arith.constant 0 : index
    %139 = vector.load %arg19[%c0_45, %c0_46] : memref<8x128xf32, #tpu.memory_space<vmem>>, vector<8x128xf32>
    tpu.vector_store %arg19[%c0_45, %c0_46], %138 {strides = array<i32>} : memref<8x128xf32, #tpu.memory_space<vmem>>, vector<8x128xf32>,
    %c0_47 = arith.constant 0 : index
    %c0_48 = arith.constant 0 : index
    %140 = vector.load %arg13[%c0_47, %c0_48] : memref<8x64xf32, #tpu.memory_space<vmem>>, vector<8x64xf32>
    %141 = arith.mulf %140, %140 : vector<8x64xf32>
    %cst_49 = arith.constant dense<0.000000e+00> : vector<8xf32>
    %142 = vector.multi_reduction <add>, %141, %cst_49 [1] : vector<8x64xf32> to vector<8xf32>
    %143 = vector.shape_cast %142 : vector<8xf32> to vector<8x1xf32>
    %144 = math.sqrt %143 : vector<8x1xf32>
    %cst_50 = arith.constant 9.99999996E-13 : f32
    %145 = vector.broadcast %cst_50 : f32 to vector<8x1xf32>
    %146 = arith.maximumf %144, %145 : vector<8x1xf32>
    %147 = vector.broadcast %146 : vector<8x1xf32> to vector<8x64xf32>
    %148 = arith.divf %140, %147 : vector<8x64xf32>
    %c0_51 = arith.constant 0 : index
    %c0_52 = arith.constant 0 : index
    %149 = vector.load %arg14[%c0_51, %c0_52] : memref<8x64xf32, #tpu.memory_space<vmem>>, vector<8x64xf32>
    %150 = vector.extract_strided_slice %148 {offsets = [0, 0], sizes = [8, 32], strides = [1, 1]} : vector<8x64xf32> to vector<8x32xf32>
    %151 = vector.extract_strided_slice %148 {offsets = [0, 32], sizes = [8, 32], strides = [1, 1]} : vector<8x64xf32> to vector<8x32xf32>
    %152 = vector.extract_strided_slice %149 {offsets = [0, 0], sizes = [8, 32], strides = [1, 1]} : vector<8x64xf32> to vector<8x32xf32>
    %153 = vector.extract_strided_slice %149 {offsets = [0, 32], sizes = [8, 32], strides = [1, 1]} : vector<8x64xf32> to vector<8x32xf32>
    %154 = arith.mulf %150, %152 : vector<8x32xf32>
    %155 = arith.mulf %151, %153 : vector<8x32xf32>
    %156 = arith.subf %154, %155 : vector<8x32xf32>
    %157 = arith.mulf %151, %152 : vector<8x32xf32>
    %158 = arith.mulf %150, %153 : vector<8x32xf32>
    %159 = arith.addf %157, %158 : vector<8x32xf32>
    %160 = tpu.concatenate %156, %159 in 1 : vector<8x32xf32>, vector<8x32xf32> -> vector<8x64xf32>
    %c0_53 = arith.constant 0 : index
    %c0_54 = arith.constant 0 : index
    %161 = vector.load %arg20[%c0_53, %c0_54] : memref<8x64xf32, #tpu.memory_space<vmem>>, vector<8x64xf32>
    tpu.vector_store %arg20[%c0_53, %c0_54], %160 {strides = array<i32>} : memref<8x64xf32, #tpu.memory_space<vmem>>, vector<8x64xf32>,
    %162 = arith.mulf %73, %73 : vector<8x32xf32>
    %163 = arith.mulf %74, %74 : vector<8x32xf32>
    %164 = arith.addf %162, %163 : vector<8x32xf32>
    %165 = math.sqrt %164 : vector<8x32xf32>
    %166 = arith.mulf %75, %75 : vector<8x32xf32>
    %167 = arith.mulf %76, %76 : vector<8x32xf32>
    %168 = arith.addf %166, %167 : vector<8x32xf32>
    %169 = math.sqrt %168 : vector<8x32xf32>
    %170 = arith.mulf %81, %81 : vector<8x32xf32>
    %171 = arith.mulf %82, %82 : vector<8x32xf32>
    %172 = arith.addf %170, %171 : vector<8x32xf32>
    %173 = math.sqrt %172 : vector<8x32xf32>
    %174 = arith.mulf %79, %79 : vector<8x32xf32>
    %175 = arith.mulf %80, %80 : vector<8x32xf32>
    %176 = arith.addf %174, %175 : vector<8x32xf32>
    %177 = math.sqrt %176 : vector<8x32xf32>
    %178 = arith.mulf %77, %77 : vector<8x32xf32>
    %179 = arith.mulf %78, %78 : vector<8x32xf32>
    %180 = arith.addf %178, %179 : vector<8x32xf32>
    %181 = math.sqrt %180 : vector<8x32xf32>
    %182 = arith.mulf %83, %83 : vector<8x32xf32>
    %183 = arith.mulf %84, %84 : vector<8x32xf32>
    %184 = arith.addf %182, %183 : vector<8x32xf32>
    %185 = math.sqrt %184 : vector<8x32xf32>
    %186 = arith.mulf %85, %85 : vector<8x32xf32>
    %187 = arith.mulf %86, %86 : vector<8x32xf32>
    %188 = arith.addf %186, %187 : vector<8x32xf32>
    %189 = math.sqrt %188 : vector<8x32xf32>
    %190 = arith.mulf %87, %87 : vector<8x32xf32>
    %191 = arith.mulf %88, %88 : vector<8x32xf32>
    %192 = arith.addf %190, %191 : vector<8x32xf32>
    %193 = math.sqrt %192 : vector<8x32xf32>
    %194 = tpu.concatenate %165, %169, %173, %177, %181, %185, %189, %193 in 1 : vector<8x32xf32>, vector<8x32xf32>, vector<8x32xf32>, vector<8x32xf32>, vector<8x32xf32>, vector<8x32xf32>, vector<8x32xf32>, vector<8x32xf32> -> vector<8x256xf32>
    %c0_55 = arith.constant 0 : index
    %c0_56 = arith.constant 0 : index
    %195 = vector.load %arg21[%c0_55, %c0_56] : memref<8x256xf32, #tpu.memory_space<vmem>>, vector<8x256xf32>
    tpu.vector_store %arg21[%c0_55, %c0_56], %194 {strides = array<i32>} : memref<8x256xf32, #tpu.memory_space<vmem>>, vector<8x256xf32>,
    %196 = arith.subf %106, %75 : vector<8x32xf32>
    %197 = arith.subf %107, %76 : vector<8x32xf32>
    %198 = arith.mulf %196, %196 : vector<8x32xf32>
    %199 = arith.mulf %197, %197 : vector<8x32xf32>
    %200 = arith.addf %198, %199 : vector<8x32xf32>
    %201 = math.sqrt %200 : vector<8x32xf32>
    %cst_57 = arith.constant dense<0.000000e+00> : vector<8xf32>
    %202 = vector.multi_reduction <add>, %201, %cst_57 [1] : vector<8x32xf32> to vector<8xf32>
    %203 = vector.shape_cast %202 : vector<8xf32> to vector<8x1xf32>
    %cst_58 = arith.constant dense<0.000000e+00> : vector<1xf32>
    %204 = vector.multi_reduction <add>, %203, %cst_58 [0] : vector<8x1xf32> to vector<1xf32>
    %205 = vector.shape_cast %204 : vector<1xf32> to vector<1x1xf32>
    %cst_59 = arith.constant 5.000000e-01 : f32
    %206 = vector.broadcast %cst_59 : f32 to vector<1x1xf32>
    %207 = arith.mulf %206, %205 : vector<1x1xf32>
    %c0_60 = arith.constant 0 : index
    %c0_61 = arith.constant 0 : index
    %208 = vector.load %arg22[%c0_60, %c0_61] : memref<1x1xf32, #tpu.memory_space<vmem>>, vector<1x1xf32>
    tpu.vector_store %arg22[%c0_60, %c0_61], %207 {strides = array<i32>} : memref<1x1xf32, #tpu.memory_space<vmem>>, vector<1x1xf32>,
    return
  }
  func.func @transform_0(%arg0: i32) -> (i32, i32) {
    %c0_i32 = arith.constant 0 : i32
    %c0_i32_0 = arith.constant 0 : i32
    %c0_i32_1 = arith.constant 0 : i32
    return %c0_i32, %c0_i32_0 : i32, i32
  }
  func.func @transform_1(%arg0: i32) -> (i32, i32) {
    %c0_i32 = arith.constant 0 : i32
    %c0_i32_0 = arith.constant 0 : i32
    %c0_i32_1 = arith.constant 0 : i32
    return %c0_i32, %c0_i32_0 : i32, i32
  }
  func.func @transform_2(%arg0: i32) -> (i32, i32) {
    %c0_i32 = arith.constant 0 : i32
    %c0_i32_0 = arith.constant 0 : i32
    %c0_i32_1 = arith.constant 0 : i32
    return %c0_i32, %c0_i32_0 : i32, i32
  }
  func.func @transform_3(%arg0: i32) -> (i32, i32) {
    %c0_i32 = arith.constant 0 : i32
    %c0_i32_0 = arith.constant 0 : i32
    %c0_i32_1 = arith.constant 0 : i32
    return %c0_i32, %c0_i32_0 : i32, i32
  }
  func.func @transform_4(%arg0: i32) -> (i32, i32) {
    %c0_i32 = arith.constant 0 : i32
    %c0_i32_0 = arith.constant 0 : i32
    %c0_i32_1 = arith.constant 0 : i32
    return %c0_i32, %c0_i32_0 : i32, i32
  }
  func.func @transform_5(%arg0: i32) -> (i32, i32) {
    %c0_i32 = arith.constant 0 : i32
    %c0_i32_0 = arith.constant 0 : i32
    %c0_i32_1 = arith.constant 0 : i32
    return %c0_i32, %c0_i32_0 : i32, i32
  }
  func.func @transform_6(%arg0: i32) -> (i32, i32) {
    %c0_i32 = arith.constant 0 : i32
    %c0_i32_0 = arith.constant 0 : i32
    %c0_i32_1 = arith.constant 0 : i32
    return %c0_i32, %c0_i32_0 : i32, i32
  }
  func.func @transform_7(%arg0: i32) -> (i32, i32) {
    %c0_i32 = arith.constant 0 : i32
    %c0_i32_0 = arith.constant 0 : i32
    %c0_i32_1 = arith.constant 0 : i32
    return %c0_i32, %c0_i32_0 : i32, i32
  }
  func.func @transform_8(%arg0: i32) -> (i32, i32) {
    %c0_i32 = arith.constant 0 : i32
    %c0_i32_0 = arith.constant 0 : i32
    %c0_i32_1 = arith.constant 0 : i32
    return %c0_i32, %c0_i32_0 : i32, i32
  }
  func.func @transform_9(%arg0: i32) -> (i32, i32) {
    %c0_i32 = arith.constant 0 : i32
    %c0_i32_0 = arith.constant 0 : i32
    %c0_i32_1 = arith.constant 0 : i32
    return %c0_i32, %c0_i32_0 : i32, i32
  }
  func.func @transform_10(%arg0: i32) -> (i32, i32) {
    %c0_i32 = arith.constant 0 : i32
    %c0_i32_0 = arith.constant 0 : i32
    %c0_i32_1 = arith.constant 0 : i32
    return %c0_i32, %c0_i32_0 : i32, i32
  }
  func.func @transform_11(%arg0: i32) -> (i32, i32) {
    %c0_i32 = arith.constant 0 : i32
    %c0_i32_0 = arith.constant 0 : i32
    %c0_i32_1 = arith.constant 0 : i32
    return %c0_i32, %c0_i32_0 : i32, i32
  }
  func.func @transform_12(%arg0: i32) -> (i32, i32) {
    %c0_i32 = arith.constant 0 : i32
    %c0_i32_0 = arith.constant 0 : i32
    %c0_i32_1 = arith.constant 0 : i32
    return %c0_i32, %c0_i32_0 : i32, i32
  }
  func.func @transform_13(%arg0: i32) -> (i32, i32) {
    %c0_i32 = arith.constant 0 : i32
    %c0_i32_0 = arith.constant 0 : i32
    %c0_i32_1 = arith.constant 0 : i32
    return %c0_i32, %c0_i32_0 : i32, i32
  }
  func.func @transform_14(%arg0: i32) -> (i32, i32) {
    %c0_i32 = arith.constant 0 : i32
    %c0_i32_0 = arith.constant 0 : i32
    %c0_i32_1 = arith.constant 0 : i32
    return %c0_i32, %c0_i32_0 : i32, i32
  }
  func.func @transform_15(%arg0: i32) -> (i32, i32) {
    %c0_i32 = arith.constant 0 : i32
    %c0_i32_0 = arith.constant 0 : i32
    %c0_i32_1 = arith.constant 0 : i32
    return %c0_i32, %c0_i32_0 : i32, i32
  }
  func.func @transform_16(%arg0: i32) -> (i32, i32) {
    %c0_i32 = arith.constant 0 : i32
    %c0_i32_0 = arith.constant 0 : i32
    %c0_i32_1 = arith.constant 0 : i32
    return %c0_i32, %c0_i32_0 : i32, i32
  }
  func.func @transform_17(%arg0: i32) -> (i32, i32) {
    %c0_i32 = arith.constant 0 : i32
    %c0_i32_0 = arith.constant 0 : i32
    %c0_i32_1 = arith.constant 0 : i32
    return %c0_i32, %c0_i32_0 : i32, i32
  }
  func.func @transform_18(%arg0: i32) -> (i32, i32) {
    %c0_i32 = arith.constant 0 : i32
    %c0_i32_0 = arith.constant 0 : i32
    %c0_i32_1 = arith.constant 0 : i32
    return %c0_i32, %c0_i32_0 : i32, i32
  }
  func.func @transform_19(%arg0: i32) -> (i32, i32) {
    %c0_i32 = arith.constant 0 : i32
    %c0_i32_0 = arith.constant 0 : i32
    %c0_i32_1 = arith.constant 0 : i32
    return %c0_i32, %c0_i32_0 : i32, i32
  }
  func.func @transform_20(%arg0: i32) -> (i32, i32) {
    %c0_i32 = arith.constant 0 : i32
    %c0_i32_0 = arith.constant 0 : i32
    %c0_i32_1 = arith.constant 0 : i32
    return %c0_i32, %c0_i32_0 : i32, i32
  }
  func.func @transform_21(%arg0: i32) -> (i32, i32) {
    %c0_i32 = arith.constant 0 : i32
    %c0_i32_0 = arith.constant 0 : i32
    %c0_i32_1 = arith.constant 0 : i32
    return %c0_i32, %c0_i32_0 : i32, i32
  }
}

module attributes {stable_mosaic.version = 11 : i64} {
  func.func @_matmul_nt_kernel(%arg0: i32, %arg1: memref<8x64xbf16, #tpu.memory_space<vmem>>, %arg2: memref<64x128xbf16, #tpu.memory_space<vmem>>, %arg3: memref<8x128xf32, #tpu.memory_space<vmem>>) attributes {dimension_semantics = [#tpu.dimension_semantics<parallel>], iteration_bounds = array<i64: 1>, scalar_prefetch = 0 : i64, scratch_operands = 0 : i64, tpu.core_type = #tpu.core_type<tc>, window_params = [{pipeline_mode = #tpu.pipeline_mode<synchronous>, transform_indices = @transform_0, window_bounds = array<i64: 8, 64>}, {transform_indices = @transform_1, window_bounds = array<i64: 64, 128>}, {transform_indices = @transform_2, window_bounds = array<i64: 8, 128>}]} {
    %c0 = arith.constant 0 : index
    %c0_0 = arith.constant 0 : index
    %0 = vector.load %arg1[%c0, %c0_0] : memref<8x64xbf16, #tpu.memory_space<vmem>>, vector<8x64xbf16>
    %c0_1 = arith.constant 0 : index
    %c0_2 = arith.constant 0 : index
    %1 = vector.load %arg2[%c0_1, %c0_2] : memref<64x128xbf16, #tpu.memory_space<vmem>>, vector<64x128xbf16>
    %cst = arith.constant dense<0.000000e+00> : vector<8x128xf32>
    %2 = tpu.matmul %0, %1, %cst {dimension_numbers = #tpu.dot_dimension_numbers<[1], [0], [0], [1], [0, 0, 1, 1], [], []>} : vector<8x64xbf16>, vector<64x128xbf16>, vector<8x128xf32> -> vector<8x128xf32>
    %c0_3 = arith.constant 0 : index
    %c0_4 = arith.constant 0 : index
    %3 = vector.load %arg3[%c0_3, %c0_4] : memref<8x128xf32, #tpu.memory_space<vmem>>, vector<8x128xf32>
    tpu.vector_store %arg3[%c0_3, %c0_4], %2 {strides = array<i32>} : memref<8x128xf32, #tpu.memory_space<vmem>>, vector<8x128xf32>,
    return
  }
  func.func @transform_0(%arg0: i32) -> (i32, i32) {
    %c0_i32 = arith.constant 0 : i32
    %c0_i32_0 = arith.constant 0 : i32
    %c0_i32_1 = arith.constant 0 : i32
    return %c0_i32, %c0_i32_0 : i32, i32
  }
  func.func @transform_1(%arg0: i32) -> (i32, i32) {
    %c0_i32 = arith.constant 0 : i32
    %c0_i32_0 = arith.constant 0 : i32
    return %c0_i32, %arg0 : i32, i32
  }
  func.func @transform_2(%arg0: i32) -> (i32, i32) {
    %c0_i32 = arith.constant 0 : i32
    %c0_i32_0 = arith.constant 0 : i32
    return %c0_i32, %arg0 : i32, i32
  }
}

</mosaic_0001>

<llo_original>
// kernel: forward.5
$region0: #{forward.5}
  #allocation0 [shape = 'u32[]', space=smem, size = 0x4, offset = 0x4, fixed_abs, tag = 'smem constant byte address 0x4 - core index']
  #allocation1 [shape = 'u32[144,128]{1,0:T(1,128)}', space=vmem, size = 0x12000, scoped, tag = 'internal scratch']
  %s0 = inlined_call_operand.vmem [shape: bf16[8,64], index: 0, kind: input, shape index: {}]
  %s1 = inlined_call_operand.vmem [shape: bf16[64,128], index: 1, kind: input, shape index: {}]
  %s2 = inlined_call_operand.hbm [shape: f32[8,128], index: 2, kind: output, shape index: {}]
  %s3 = sld [smem:[#allocation0]]
  $region18: #{forward.5} parent=0
    _
  %s5 = ssub.s32 1, %s3
  %s6 = scalar_select 0, %s5, %s3
  $region1: #{forward.5} parent=0
    #allocation2 [shape = 'u8[4096]{0}', space=vmem, size = 0x1000, scoped, tag = 'output window, operand 0, single buffered']
    #allocation3 [shape = 's32[1]{0}', space=sflag, size = 0x4, scoped, tag = 'scoped memory for forward.5']
    %7 = vsyncpa [#allocation3], 0
    // Predicated region
    $region2: #{forward.5} parent=1 // pred_check
      _
    $region3: #{forward.5} parent=1 // pred_check_branch
      %9 = sbr.rel (0) target = $region5
    $region4: #{forward.5} parent=1 // pred_region
      _
    $region5: #{forward.5} parent=1 // pred_fallthru
      _
    // Predicated region
    $region6: #{forward.5} parent=1 // pred_check
      _
    $region7: #{forward.5} parent=1 // pred_check_branch
      %11 = sbr.rel (0) target = $region9
    $region8: #{forward.5} parent=1 // pred_region
      _
    $region9: #{forward.5} parent=1 // pred_fallthru
      _
    %v13 = vld [vmem:[%s0] sm:$0xf]
    %v14 = vld [vmem:[%s1] sm:$0xf]
    %v15 = vld [vmem:[%s1 + $0x4] sm:$0xf]
    %v16 = vld [vmem:[%s1 + $0x8] sm:$0xf]
    %v17 = vld [vmem:[%s1 + $0xc] sm:$0xf]
    %v18 = vld [vmem:[%s1 + $0x10] sm:$0xf]
    %v19 = vld [vmem:[%s1 + $0x14] sm:$0xf]
    %v20 = vld [vmem:[%s1 + $0x18] sm:$0xf]
    %v21 = vld [vmem:[%s1 + $0x1c] sm:$0xf]
    %v30 = vunpack.c.l.b16 %v14
    %v31 = vunpack.c.l.b16 %v15
    %v32 = vunpack.c.l.b16 %v16
    %v33 = vunpack.c.l.b16 %v17
    %v34 = vunpack.c.l.b16 %v18
    %v35 = vunpack.c.l.b16 %v19
    %v36 = vunpack.c.l.b16 %v20
    %v37 = vunpack.c.l.b16 %v21
    %v38 = vpack.c.b16 %v31, %v30
    %v39 = vpack.c.b16 %v33, %v32
    %v40 = vpack.c.b16 %v35, %v34
    %v41 = vpack.c.b16 %v37, %v36
    %vm46 = vcmask 523264
    %v48 = vsel %vm46, %v13, 0
    %50 = vmatprep.subr.bf16.mxu0 0
    %51 = vmatpush1.bf16.msra.mxu0 0
    %52 = vmatprep.subr.bf16.mxu0 0
    %53 = vmatpush1.bf16.msra.mxu0 0
    %54 = vmatprep.subr.bf16.mxu0 0
    %55 = vmatpush1.bf16.msra.mxu0 0
    %56 = vmatprep.subr.bf16.mxu0 0
    %57 = vmatpush1.bf16.msra.mxu0 0
    %58 = vmatprep.subr.bf16.mxu0 0
    %59 = vmatpush1.bf16.msra.mxu0 %v41
    %60 = vmatprep.subr.bf16.mxu0 0
    %61 = vmatpush1.bf16.msra.mxu0 %v40
    %62 = vmatprep.subr.bf16.mxu0 0
    %63 = vmatpush1.bf16.msra.mxu0 %v39
    %64 = vmatprep.subr.bf16.mxu0 0
    %65 = vmatpush1.bf16.msra.mxu0 %v38
    %66 = vmatprep.subr.bf16.mxu0 0
    %67 = vmatpush2.bf16.msra.mxu0 0
    %68 = vmatprep.subr.bf16.mxu0 0
    %69 = vmatpush2.bf16.msra.mxu0 0
    %70 = vmatprep.subr.bf16.mxu0 0
    %71 = vmatpush2.bf16.msra.mxu0 0
    %72 = vmatprep.subr.bf16.mxu0 0
    %73 = vmatpush2.bf16.msra.mxu0 0
    %74 = vmatprep.subr.bf16.mxu0 0
    %75 = vmatpush2.bf16.msra.mxu0 0
    %76 = vmatprep.subr.bf16.mxu0 0
    %77 = vmatpush2.bf16.msra.mxu0 0
    %78 = vmatprep.subr.bf16.mxu0 0
    %79 = vmatpush2.bf16.msra.mxu0 0
    %80 = vmatprep.subr.bf16.mxu0 0
    %81 = vmatpush2.bf16.msra.mxu0 0
    %82 = vmatprep.mubr.bf16.mxu0 0
    %83 = vmatmul.mubr.bf16.gmra.mxu0 %v48
    %v84 = vpop.f32.mrf.mxu0
    %v85 = vadd.f32 0.0, %v84
    %v86 = vpop.f32.mrf.mxu0
    %v87 = vpop.f32.mrf.mxu0
    %v88 = vpop.f32.mrf.mxu0
    %89 = vdwg.mxu0
    %90 = vst [vmem:[#allocation2] sm:$0xff] %v85
    // Predicated region
    $region10: #{forward.5} parent=1 // pred_check
      _
    $region11: #{forward.5} parent=1 // pred_check_branch
      %92 = sbr.rel (0) target = $region13
    $region12: #{forward.5} parent=1 // pred_region
      %s94 = ssub.s32 128, 128
      %95 = vsyncadd [#allocation3], %s94
      %s97 = sshll.u32 [#allocation2], 4
      %s98 = int_to_ptr.vmem [resolvable:$true] %s97
      %100 = dma.vmem_to_hbm [thread:$0]  %s98, 128, %s2, [#allocation3]
    $region13: #{forward.5} parent=1 // pred_fallthru
      _
    // Predicated region
    $region14: #{forward.5} parent=1 // pred_check
      _
    $region15: #{forward.5} parent=1 // pred_check_branch
      %102 = sbr.rel (0) target = $region17
    $region16: #{forward.5} parent=1 // pred_region
      %103 = dma.done [#allocation3], 128
    $region17: #{forward.5} parent=1 // pred_fallthru
      _
    %104 = vsyncpa [#allocation3], 1

// kernel: forward.4
$region0: #{forward.4}
  #allocation0 [shape = 'u32[]', space=smem, size = 0x4, offset = 0x4, fixed_abs, tag = 'smem constant byte address 0x4 - core index']
  #allocation1 [shape = 'u32[144,128]{1,0:T(1,128)}', space=vmem, size = 0x12000, scoped, tag = 'internal scratch']
  %s0 = inlined_call_operand.vmem [shape: bf16[16,64], index: 0, kind: input, shape index: {}]
  %s1 = inlined_call_operand.vmem [shape: bf16[64,256], index: 1, kind: input, shape index: {}]
  %s2 = inlined_call_operand.vmem [shape: f32[16,256], index: 2, kind: output, shape index: {}]
  %s3 = sld [smem:[#allocation0]]
  $region18: #{forward.4} parent=0
    _
  %s5 = ssub.s32 1, %s3
  %s6 = scalar_select 0, %s5, %s3
  // Predicated region
  $region2: #{forward.4} parent=0 // pred_check
    _
  $region3: #{forward.4} parent=0 // pred_check_branch
    %8 = sbr.rel (0) target = $region5
  $region4: #{forward.4} parent=0 // pred_region
    _
  $region5: #{forward.4} parent=0 // pred_fallthru
    _
  // Predicated region
  $region6: #{forward.4} parent=0 // pred_check
    _
  $region7: #{forward.4} parent=0 // pred_check_branch
    %10 = sbr.rel (0) target = $region9
  $region8: #{forward.4} parent=0 // pred_region
    _
  $region9: #{forward.4} parent=0 // pred_fallthru
    _
  %v12 = vld [vmem:[%s0] sm:$0xf]
  %v13 = vld [vmem:[%s0 + $0x4] sm:$0xf]
  %v14 = vld [vmem:[%s1] sm:$0xff]
  %v15 = vld [vmem:[%s1 + $0x8] sm:$0xff]
  %v16 = vld [vmem:[%s1 + $0x10] sm:$0xff]
  %v17 = vld [vmem:[%s1 + $0x18] sm:$0xff]
  %v18 = vld [vmem:[%s1 + $0x20] sm:$0xff]
  %v19 = vld [vmem:[%s1 + $0x28] sm:$0xff]
  %v20 = vld [vmem:[%s1 + $0x30] sm:$0xff]
  %v21 = vld [vmem:[%s1 + $0x38] sm:$0xff]
  %v24 = vunpack.c.l.b16 %v12
  %v25 = vunpack.c.l.b16 %v13
  %v26 = vpack.c.b16 %v25, %v24
  %v35 = vunpack.c.l.b16 %v14
  %v36 = vunpack.c.h.b16 %v14
  %v37 = vunpack.c.l.b16 %v15
  %v38 = vunpack.c.h.b16 %v15
  %v39 = vunpack.c.l.b16 %v16
  %v40 = vunpack.c.h.b16 %v16
  %v41 = vunpack.c.l.b16 %v17
  %v42 = vunpack.c.h.b16 %v17
  %v43 = vunpack.c.l.b16 %v18
  %v44 = vunpack.c.h.b16 %v18
  %v45 = vunpack.c.l.b16 %v19
  %v46 = vunpack.c.h.b16 %v19
  %v47 = vunpack.c.l.b16 %v20
  %v48 = vunpack.c.h.b16 %v20
  %v49 = vunpack.c.l.b16 %v21
  %v50 = vunpack.c.h.b16 %v21
  %v51 = vpack.c.b16 %v37, %v35
  %v52 = vpack.c.b16 %v38, %v36
  %v53 = vpack.c.b16 %v41, %v39
  %v54 = vpack.c.b16 %v42, %v40
  %v55 = vpack.c.b16 %v45, %v43
  %v56 = vpack.c.b16 %v46, %v44
  %v57 = vpack.c.b16 %v49, %v47
  %v58 = vpack.c.b16 %v50, %v48
  %vm67 = vcmask 523264
  %v69 = vsel %vm67, %v26, 0
  %71 = vmatprep.subr.bf16.mxu0 0
  %72 = vmatpush1.bf16.msra.mxu0 0
  %73 = vmatprep.subr.bf16.mxu0 0
  %74 = vmatpush1.bf16.msra.mxu0 0
  %75 = vmatprep.subr.bf16.mxu0 0
  %76 = vmatpush1.bf16.msra.mxu0 0
  %77 = vmatprep.subr.bf16.mxu0 0
  %78 = vmatpush1.bf16.msra.mxu0 0
  %79 = vmatprep.subr.bf16.mxu0 %v58
  %80 = vmatpush1.bf16.msra.mxu0 %v57
  %81 = vmatprep.subr.bf16.mxu0 %v56
  %82 = vmatpush1.bf16.msra.mxu0 %v55
  %83 = vmatprep.subr.bf16.mxu0 %v54
  %84 = vmatpush1.bf16.msra.mxu0 %v53
  %85 = vmatprep.subr.bf16.mxu0 %v52
  %86 = vmatpush1.bf16.msra.mxu0 %v51
  %87 = vmatprep.subr.bf16.mxu0 0
  %88 = vmatpush2.bf16.msra.mxu0 0
  %89 = vmatprep.subr.bf16.mxu0 0
  %90 = vmatpush2.bf16.msra.mxu0 0
  %91 = vmatprep.subr.bf16.mxu0 0
  %92 = vmatpush2.bf16.msra.mxu0 0
  %93 = vmatprep.subr.bf16.mxu0 0
  %94 = vmatpush2.bf16.msra.mxu0 0
  %95 = vmatprep.subr.bf16.mxu0 0
  %96 = vmatpush2.bf16.msra.mxu0 0
  %97 = vmatprep.subr.bf16.mxu0 0
  %98 = vmatpush2.bf16.msra.mxu0 0
  %99 = vmatprep.subr.bf16.mxu0 0
  %100 = vmatpush2.bf16.msra.mxu0 0
  %101 = vmatprep.subr.bf16.mxu0 0
  %102 = vmatpush2.bf16.msra.mxu0 0
  %103 = vmatprep.mubr.bf16.mxu0 0
  %104 = vmatmul.mubr.bf16.gmra.mxu0 %v69
  %v105 = vpop.f32.mrf.mxu0
  %v106 = vadd.f32 0.0, %v105
  %v107 = vpop.f32.mrf.mxu0
  %v108 = vadd.f32 0.0, %v107
  %v109 = vpop.f32.mrf.mxu0
  %v110 = vadd.f32 0.0, %v109
  %v111 = vpop.f32.mrf.mxu0
  %v112 = vadd.f32 0.0, %v111
  %113 = vdwg.mxu0
  %114 = vst [vmem:[%s2] sm:$0xff] %v106
  %115 = vst [vmem:[%s2 + $0x8] sm:$0xff] %v108
  %116 = vst [vmem:[%s2 + $0x10] sm:$0xff] %v110
  %117 = vst [vmem:[%s2 + $0x18] sm:$0xff] %v112
  // Predicated region
  $region10: #{forward.4} parent=0 // pred_check
    _
  $region11: #{forward.4} parent=0 // pred_check_branch
    %119 = sbr.rel (0) target = $region13
  $region12: #{forward.4} parent=0 // pred_region
    _
  $region13: #{forward.4} parent=0 // pred_fallthru
    _
  // Predicated region
  $region14: #{forward.4} parent=0 // pred_check
    _
  $region15: #{forward.4} parent=0 // pred_check_branch
    %121 = sbr.rel (0) target = $region17
  $region16: #{forward.4} parent=0 // pred_region
    _
  $region17: #{forward.4} parent=0 // pred_fallthru
    _

// kernel: forward.3
$region0: #{forward.3}
  #allocation0 [shape = 'u32[]', space=smem, size = 0x4, offset = 0x4, fixed_abs, tag = 'smem constant byte address 0x4 - core index']
  #allocation1 [shape = 'u32[144,128]{1,0:T(1,128)}', space=vmem, size = 0x12000, scoped, tag = 'internal scratch']
  %s0 = inlined_call_operand.vmem [shape: f32[8,64], index: 0, kind: input, shape index: {}]
  %s1 = inlined_call_operand.vmem [shape: f32[8,64], index: 1, kind: input, shape index: {}]
  %s2 = inlined_call_operand.vmem [shape: f32[8,64], index: 2, kind: input, shape index: {}]
  %s3 = inlined_call_operand.vmem [shape: f32[8,64], index: 3, kind: input, shape index: {}]
  %s4 = inlined_call_operand.vmem [shape: f32[8,64], index: 4, kind: input, shape index: {}]
  %s5 = inlined_call_operand.vmem [shape: f32[8,64], index: 5, kind: input, shape index: {}]
  %s6 = inlined_call_operand.vmem [shape: f32[8,64], index: 6, kind: input, shape index: {}]
  %s7 = inlined_call_operand.vmem [shape: f32[8,64], index: 7, kind: input, shape index: {}]
  %s8 = inlined_call_operand.vmem [shape: f32[8,64], index: 8, kind: input, shape index: {}]
  %s9 = inlined_call_operand.vmem [shape: f32[8,64], index: 9, kind: input, shape index: {}]
  %s10 = inlined_call_operand.vmem [shape: f32[8,64], index: 10, kind: input, shape index: {}]
  %s11 = inlined_call_operand.vmem [shape: f32[8,1], index: 11, kind: input, shape index: {}]
  %s12 = inlined_call_operand.vmem [shape: f32[8,64], index: 12, kind: input, shape index: {}]
  %s13 = inlined_call_operand.vmem [shape: f32[8,64], index: 13, kind: input, shape index: {}]
  %s14 = inlined_call_operand.vmem [shape: f32[160,200], index: 14, kind: input, shape index: {}]
  %s15 = inlined_call_operand.vmem [shape: f32[1,200], index: 15, kind: input, shape index: {}]
  %s16 = inlined_call_operand.vmem [shape: f32[200,32], index: 16, kind: input, shape index: {}]
  %s17 = inlined_call_operand.vmem [shape: f32[1,32], index: 17, kind: input, shape index: {}]
  %s18 = inlined_call_operand.vmem [shape: f32[8,128], index: 18, kind: output, shape index: {0}]
  %s19 = inlined_call_operand.vmem [shape: f32[8,64], index: 19, kind: output, shape index: {1}]
  %s20 = inlined_call_operand.vmem [shape: f32[8,256], index: 20, kind: output, shape index: {2}]
  %s21 = inlined_call_operand.hbm [shape: f32[1,1], index: 21, kind: output, shape index: {3}]
  %22 = xla_tuple %s18, %s19, %s20, %s21
  %s23 = sld [smem:[#allocation0]]
  $region106: #{forward.3} parent=0
    _
  %s25 = ssub.s32 1, %s23
  %s26 = scalar_select 0, %s25, %s23
  $region1: #{forward.3} parent=0
    #allocation2 [shape = 'u8[512]{0}', space=vmem, size = 0x400, scoped, tag = 'output window, operand 3, single buffered']
    #allocation3 [shape = 's32[1]{0}', space=sflag, size = 0x4, scoped, tag = 'scoped memory for forward.3']
    %27 = vsyncpa [#allocation3], 0
    // Predicated region
    $region2: #{forward.3} parent=1 // pred_check
      _
    $region3: #{forward.3} parent=1 // pred_check_branch
      %29 = sbr.rel (0) target = $region5
    $region4: #{forward.3} parent=1 // pred_region
      _
    $region5: #{forward.3} parent=1 // pred_fallthru
      _
    // Predicated region
    $region6: #{forward.3} parent=1 // pred_check
      _
    $region7: #{forward.3} parent=1 // pred_check_branch
      %31 = sbr.rel (0) target = $region9
    $region8: #{forward.3} parent=1 // pred_region
      _
    $region9: #{forward.3} parent=1 // pred_fallthru
      _
    // Predicated region
    $region10: #{forward.3} parent=1 // pred_check
      _
    $region11: #{forward.3} parent=1 // pred_check_branch
      %33 = sbr.rel (0) target = $region13
    $region12: #{forward.3} parent=1 // pred_region
      _
    $region13: #{forward.3} parent=1 // pred_fallthru
      _
    // Predicated region
    $region14: #{forward.3} parent=1 // pred_check
      _
    $region15: #{forward.3} parent=1 // pred_check_branch
      %35 = sbr.rel (0) target = $region17
    $region16: #{forward.3} parent=1 // pred_region
      _
    $region17: #{forward.3} parent=1 // pred_fallthru
      _
    // Predicated region
    $region18: #{forward.3} parent=1 // pred_check
      _
    $region19: #{forward.3} parent=1 // pred_check_branch
      %37 = sbr.rel (0) target = $region21
    $region20: #{forward.3} parent=1 // pred_region
      _
    $region21: #{forward.3} parent=1 // pred_fallthru
      _
    // Predicated region
    $region22: #{forward.3} parent=1 // pred_check
      _
    $region23: #{forward.3} parent=1 // pred_check_branch
      %39 = sbr.rel (0) target = $region25
    $region24: #{forward.3} parent=1 // pred_region
      _
    $region25: #{forward.3} parent=1 // pred_fallthru
      _
    // Predicated region
    $region26: #{forward.3} parent=1 // pred_check
      _
    $region27: #{forward.3} parent=1 // pred_check_branch
      %41 = sbr.rel (0) target = $region29
    $region28: #{forward.3} parent=1 // pred_region
      _
    $region29: #{forward.3} parent=1 // pred_fallthru
      _
    // Predicated region
    $region30: #{forward.3} parent=1 // pred_check
      _
    $region31: #{forward.3} parent=1 // pred_check_branch
      %43 = sbr.rel (0) target = $region33
    $region32: #{forward.3} parent=1 // pred_region
      _
    $region33: #{forward.3} parent=1 // pred_fallthru
      _
    // Predicated region
    $region34: #{forward.3} parent=1 // pred_check
      _
    $region35: #{forward.3} parent=1 // pred_check_branch
      %45 = sbr.rel (0) target = $region37
    $region36: #{forward.3} parent=1 // pred_region
      _
    $region37: #{forward.3} parent=1 // pred_fallthru
      _
    // Predicated region
    $region38: #{forward.3} parent=1 // pred_check
      _
    $region39: #{forward.3} parent=1 // pred_check_branch
      %47 = sbr.rel (0) target = $region41
    $region40: #{forward.3} parent=1 // pred_region
      _
    $region41: #{forward.3} parent=1 // pred_fallthru
      _
    // Predicated region
    $region42: #{forward.3} parent=1 // pred_check
      _
    $region43: #{forward.3} parent=1 // pred_check_branch
      %49 = sbr.rel (0) target = $region45
    $region44: #{forward.3} parent=1 // pred_region
      _
    $region45: #{forward.3} parent=1 // pred_fallthru
      _
    // Predicated region
    $region46: #{forward.3} parent=1 // pred_check
      _
    $region47: #{forward.3} parent=1 // pred_check_branch
      %51 = sbr.rel (0) target = $region49
    $region48: #{forward.3} parent=1 // pred_region
      _
    $region49: #{forward.3} parent=1 // pred_fallthru
      _
    // Predicated region
    $region50: #{forward.3} parent=1 // pred_check
      _
    $region51: #{forward.3} parent=1 // pred_check_branch
      %53 = sbr.rel (0) target = $region53
    $region52: #{forward.3} parent=1 // pred_region
      _
    $region53: #{forward.3} parent=1 // pred_fallthru
      _
    // Predicated region
    $region54: #{forward.3} parent=1 // pred_check
      _
    $region55: #{forward.3} parent=1 // pred_check_branch
      %55 = sbr.rel (0) target = $region57
    $region56: #{forward.3} parent=1 // pred_region
      _
    $region57: #{forward.3} parent=1 // pred_fallthru
      _
    // Predicated region
    $region58: #{forward.3} parent=1 // pred_check
      _
    $region59: #{forward.3} parent=1 // pred_check_branch
      %57 = sbr.rel (0) target = $region61
    $region60: #{forward.3} parent=1 // pred_region
      _
    $region61: #{forward.3} parent=1 // pred_fallthru
      _
    // Predicated region
    $region62: #{forward.3} parent=1 // pred_check
      _
    $region63: #{forward.3} parent=1 // pred_check_branch
      %59 = sbr.rel (0) target = $region65
    $region64: #{forward.3} parent=1 // pred_region
      _
    $region65: #{forward.3} parent=1 // pred_fallthru
      _
    // Predicated region
    $region66: #{forward.3} parent=1 // pred_check
      _
    $region67: #{forward.3} parent=1 // pred_check_branch
      %61 = sbr.rel (0) target = $region69
    $region68: #{forward.3} parent=1 // pred_region
      _
    $region69: #{forward.3} parent=1 // pred_fallthru
      _
    // Predicated region
    $region70: #{forward.3} parent=1 // pred_check
      _
    $region71: #{forward.3} parent=1 // pred_check_branch
      %63 = sbr.rel (0) target = $region73
    $region72: #{forward.3} parent=1 // pred_region
      _
    $region73: #{forward.3} parent=1 // pred_fallthru
      _
    %v64 = vld [vmem:[%s0] sm:$0xff]
    %v65 = vmul.f32 %v64, %v64
    %vm66 = vcmask 523264
    %v67 = vsel %vm66, %v65, 0.0
    %68 = vadd.xlane.f32.xlu0 %v67
    %v69 = vpop.xlane.xlu0 %68
    %v70 = vrsqrt.pop %v69
    %v71 = vmul.f32 %v69, %v70
    %vm72 = vcmp.eq.f32.partialorder %v69, inf
    %v73 = vsel %vm72, %v69, %v71
    %vm74 = vcmp.eq.f32.partialorder %v69, 0.0
    %v75 = vand.u32 %v69, 2147483648
    %v76 = vsel %vm74, %v75, %v73
    %v77 = vmax.f32 %v76, 1e-12
    %v78 = vrcp.pop %v77
    %v79 = vmul.f32 %v64, %v78
    %v80 = vld [vmem:[%s6] sm:$0xff]
    %v81 = vld [vmem:[%s7] sm:$0xff]
    %v82 = vld [vmem:[%s11] sm:$0xff]
    %84 = vset.pattern.permute.xlu0 0
    %85 = vperm.xlu0 %84, %v82
    %v86 = vpop.permute.xlu0 %85
    %v88 = vmul.f32 %v81, %v86
    %v89 = vld [vmem:[%s8] sm:$0xff]
    %v90 = vadd.f32 %v88, %v89
    %v91 = vand.u32 2147483647, %v90
    %vm92 = vcmp.le.f32.partialorder %v91, 0.7853982
    %vm93 = vcmp.lt.s32.totalorder %v90, 0
    %v94 = vand.u32 %v90, 2139095040
    %v95 = vshrl.u32 %v94, 23
    %v96 = vsub.s32 %v95, 127
    %v97 = vand.u32 2147483647, %v90
    %v98 = vand.u32 %v97, 8388607
    %v99 = vor.u32 %v98, 8388608
    %v100 = vsub.s32 0, %v99
    %v101 = vadd.s32 %v96, 1
    %vm102 = vcmp.gt.s32.totalorder %v101, 0
    %v103 = vsel %vm102, %v101, 0
    %v104 = vshrl.u32 %v103, 5
    %v105 = vand.u32 %v103, 31
    %v106 = vsub.s32 32, %v105
    %v107 = vshrl.u32 683565275, %v106
    %v108 = vshll.u32 683565275, %v105
    %v109 = vshrl.u32 2475754826, %v106
    %v110 = vor.u32 %v108, %v109
    %v111 = vshll.u32 2475754826, %v105
    %v112 = vshrl.u32 2131351028, %v106
    %v113 = vor.u32 %v111, %v112
    %v114 = vshll.u32 2131351028, %v105
    %v115 = vshrl.u32 2102212464, %v106
    %v116 = vor.u32 %v114, %v115
    %v117 = vshll.u32 2102212464, %v105
    %v118 = vshrl.u32 920167782, %v106
    %v119 = vor.u32 %v117, %v118
    %v120 = vshll.u32 920167782, %v105
    %v121 = vshrl.u32 1326507024, %v106
    %v122 = vor.u32 %v120, %v121
    %vm123 = vcmp.lt.s32.totalorder %v104, 1
    %vm124 = vcmp.lt.s32.totalorder %v104, 2
    %vm125 = vcmp.lt.s32.totalorder %v104, 3
    %vm126 = vcmp.lt.s32.totalorder %v104, 4
    %v127 = vsel %vm123, %v107, %v110
    %v128 = vsel %vm126, %v116, 2102212464
    %v129 = vsel %vm125, %v113, %v128
    %v130 = vsel %vm124, %v127, %v129
    %v131 = vsel %vm123, %v110, %v113
    %v132 = vsel %vm126, %v119, 920167782
    %v133 = vsel %vm125, %v116, %v132
    %v134 = vsel %vm124, %v131, %v133
    %v135 = vsel %vm123, %v113, %v116
    %v136 = vsel %vm126, %v122, 1326507024
    %v137 = vsel %vm125, %v119, %v136
    %v138 = vsel %vm124, %v135, %v137
    %v139 = vshll.u32 %v99, 8
    %v140 = vmul.u32.u64.compose %v139, %v138
    %v141 = vextract.low.u32 %v140
    %v142 = vextract.high.u32 %v140
    %v143 = vmul.u32.u64.compose %v139, %v134
    %v144 = vextract.low.u32 %v143
    %v145 = vextract.high.u32 %v143
    %v146 = vmul.u32 %v139, %v130
    %v147 = vadd.s32 %v142, %v144
    %vm148 = vc.u32 %v142, %v144
    %v149 = vadd.s32 %v145, 1
    %v150 = vsel %vm148, %v149, %v145
    %v151 = vadd.s32 %v146, %v150
    %v152 = vadd.s32 %v151, 536870912
    %v153 = vshrl.u32 %v152, 30
    %v154 = vshll.u32 %v153, 30
    %v155 = vsub.s32 %v151, %v154
    %vm156 = vcmp.lt.s32.totalorder %v155, 0
    %v157 = vsub.s32 0, %v155
    %v158 = vsel %vm156, %v157, %v155
    %v159 = vclz %v158
    %v160 = vsub.s32 %v159, 2
    %vm161 = vcmp.gt.s32.totalorder 0, %v160
    %v162 = vsel %vm161, 0, %v160
    %v163 = vsub.s32 32, %v162
    %v164 = vshll.u32 %v155, %v162
    %v165 = vshrl.u32 %v147, %v163
    %v166 = vor.u32 %v164, %v165
    %v167 = vsub.s32 4294967266, %v162
    %v168 = vadd.s32 %v167, 127
    %v169 = vshll.u32 %v168, 23
    %v170 = vor.u32 4788187, %v169
    %v171 = vand.u32 2147483647, %v170
    %v173 = vcvt.s32.f32 %v166
    %v174 = vmul.f32 %v173, %v171
    %v175 = vxor.u32 %v174, 2147483648
    %v176 = vsel %vm93, %v175, %v174
    %v177 = vsub.s32 4, %v153
    %v178 = vsel %vm93, %v177, %v153
    %v179 = vsel %vm92, %v90, %v176
    %v180 = vsel %vm92, 0, %v178
    %v181 = vcosq.f32.pop %v179
    %v182 = vsinq.f32.pop %v179
    %vm183 = vweird.f32 %v90
    %v184 = vadd.s32 %v180, 3
    %v185 = vand.u32 %v184, 3
    %vm186 = vcmp.lt.s32.totalorder %v185, 2
    %vm187 = vcmp.eq.s32.totalorder %v185, 0
    %v188 = vxor.u32 %v182, 2147483648
    %v189 = vsel %vm187, %v181, %v188
    %vm190 = vcmp.eq.s32.totalorder %v185, 2
    %v191 = vxor.u32 %v181, 2147483648
    %v192 = vsel %vm190, %v191, %v182
    %v193 = vsel %vm186, %v189, %v192
    %v194 = vsel %vm183, nan, %v193
    %v195 = vmul.f32 %v80, %v194
    %v196 = vld [vmem:[%s1] sm:$0xff]
    %v197 = vmul.f32 %v79, %v196
    %v198 = vsel %vm66, %v197, 0.0
    %199 = vadd.xlane.f32.xlu0 %v198
    %v200 = vpop.xlane.xlu0 %199
    %v201 = vmul.f32 %v79, %v200
    %v202 = vsub.f32 %v196, %v201
    %v203 = vld [vmem:[%s2] sm:$0xff]
    %v204 = vmul.f32 %v79, %v203
    %v205 = vsel %vm66, %v204, 0.0
    %206 = vadd.xlane.f32.xlu0 %v205
    %v207 = vpop.xlane.xlu0 %206
    %v208 = vmul.f32 %v79, %v207
    %v209 = vsub.f32 %v203, %v208
    %v210 = vld [vmem:[%s3] sm:$0xff]
    %v211 = vmul.f32 %v79, %v210
    %v212 = vsel %vm66, %v211, 0.0
    %213 = vadd.xlane.f32.xlu0 %v212
    %v214 = vpop.xlane.xlu0 %213
    %v215 = vmul.f32 %v79, %v214
    %v216 = vsub.f32 %v210, %v215
    %v217 = vld [vmem:[%s4] sm:$0xff]
    %v218 = vmul.f32 %v79, %v217
    %v219 = vsel %vm66, %v218, 0.0
    %220 = vadd.xlane.f32.xlu0 %v219
    %v221 = vpop.xlane.xlu0 %220
    %v222 = vmul.f32 %v79, %v221
    %v223 = vsub.f32 %v217, %v222
    %v224 = vld [vmem:[%s5] sm:$0xff]
    %v225 = vmul.f32 %v79, %v224
    %v226 = vsel %vm66, %v225, 0.0
    %227 = vadd.xlane.f32.xlu0 %v226
    %v228 = vpop.xlane.xlu0 %227
    %v229 = vmul.f32 %v79, %v228
    %v230 = vsub.f32 %v224, %v229
    %v231 = vmul.f32 %v79, %v195
    %v232 = vsel %vm66, %v231, 0.0
    %233 = vadd.xlane.f32.xlu0 %v232
    %v234 = vpop.xlane.xlu0 %233
    %v235 = vmul.f32 %v79, %v234
    %v236 = vsub.f32 %v195, %v235
    %v237 = vld [vmem:[%s9] sm:$0xff]
    %v238 = vmul.f32 %v79, %v237
    %v239 = vsel %vm66, %v238, 0.0
    %240 = vadd.xlane.f32.xlu0 %v239
    %v241 = vpop.xlane.xlu0 %240
    %v242 = vmul.f32 %v79, %v241
    %v243 = vsub.f32 %v237, %v242
    %v244 = vld [vmem:[%s10] sm:$0xff]
    %v245 = vmul.f32 %v79, %v244
    %v246 = vsel %vm66, %v245, 0.0
    %247 = vadd.xlane.f32.xlu0 %v246
    %v248 = vpop.xlane.xlu0 %247
    %v249 = vmul.f32 %v79, %v248
    %v250 = vsub.f32 %v244, %v249
    %252 = vrot.lane.b32.xlu0 %v243, 32
    %v253 = vpop.permute.xlu0 %252
    %256 = vrot.lane.b32.xlu0 %v236, 64
    %v257 = vpop.permute.xlu0 %256
    %260 = vrot.lane.b32.xlu0 %v250, 96
    %v261 = vpop.permute.xlu0 %260
    %vm263 = vcmask 261120
    %v264 = vsel %vm263, %v230, %v253
    %v265 = vsel %vm66, %v264, %v257
    %vm266 = vcmask 785408
    %v267 = vsel %vm266, %v265, %v261
    %269 = vrot.lane.b32.xlu0 %v230, 96
    %v270 = vpop.permute.xlu0 %269
    %272 = vrot.lane.b32.xlu0 %v236, 32
    %v273 = vpop.permute.xlu0 %272
    %275 = vrot.lane.b32.xlu0 %v250, 64
    %v276 = vpop.permute.xlu0 %275
    %279 = vrot.lane.b32.xlu0 %v223, 96
    %v280 = vpop.permute.xlu0 %279
    %v281 = vsel %vm263, %v270, %v243
    %v282 = vsel %vm66, %v281, %v273
    %v283 = vsel %vm266, %v282, %v276
    %v284 = vld [vmem:[%s14] sm:$0xff]
    %v285 = vld [vmem:[%s14 + $0x8] sm:$0xff]
    %v286 = vld [vmem:[%s14 + $0x10] sm:$0xff]
    %v287 = vld [vmem:[%s14 + $0x18] sm:$0xff]
    %v288 = vld [vmem:[%s14 + $0x20] sm:$0xff]
    %v289 = vld [vmem:[%s14 + $0x28] sm:$0xff]
    %v290 = vld [vmem:[%s14 + $0x30] sm:$0xff]
    %v291 = vld [vmem:[%s14 + $0x38] sm:$0xff]
    %v292 = vld [vmem:[%s14 + $0x40] sm:$0xff]
    %v293 = vld [vmem:[%s14 + $0x48] sm:$0xff]
    %v294 = vld [vmem:[%s14 + $0x50] sm:$0xff]
    %v295 = vld [vmem:[%s14 + $0x58] sm:$0xff]
    %v296 = vld [vmem:[%s14 + $0x60] sm:$0xff]
    %v297 = vld [vmem:[%s14 + $0x68] sm:$0xff]
    %v298 = vld [vmem:[%s14 + $0x70] sm:$0xff]
    %v299 = vld [vmem:[%s14 + $0x78] sm:$0xff]
    %v300 = vld [vmem:[%s14 + $0x80] sm:$0xff]
    %v301 = vld [vmem:[%s14 + $0x88] sm:$0xff]
    %v302 = vld [vmem:[%s14 + $0x90] sm:$0xff]
    %v303 = vld [vmem:[%s14 + $0x98] sm:$0xff]
    %v304 = vld [vmem:[%s14 + $0xa0] sm:$0xff]
    %v305 = vld [vmem:[%s14 + $0xa8] sm:$0xff]
    %v306 = vld [vmem:[%s14 + $0xb0] sm:$0xff]
    %v307 = vld [vmem:[%s14 + $0xb8] sm:$0xff]
    %v308 = vld [vmem:[%s14 + $0xc0] sm:$0xff]
    %v309 = vld [vmem:[%s14 + $0xc8] sm:$0xff]
    %v310 = vld [vmem:[%s14 + $0xd0] sm:$0xff]
    %v311 = vld [vmem:[%s14 + $0xd8] sm:$0xff]
    %v312 = vld [vmem:[%s14 + $0xe0] sm:$0xff]
    %v313 = vld [vmem:[%s14 + $0xe8] sm:$0xff]
    %v314 = vld [vmem:[%s14 + $0xf0] sm:$0xff]
    %v315 = vld [vmem:[%s14 + $0xf8] sm:$0xff]
    %v316 = vld [vmem:[%s14 + $0x100] sm:$0xff]
    %v317 = vld [vmem:[%s14 + $0x108] sm:$0xff]
    %v318 = vld [vmem:[%s14 + $0x110] sm:$0xff]
    %v319 = vld [vmem:[%s14 + $0x118] sm:$0xff]
    %v320 = vld [vmem:[%s14 + $0x120] sm:$0xff]
    %v321 = vld [vmem:[%s14 + $0x128] sm:$0xff]
    %v322 = vld [vmem:[%s14 + $0x130] sm:$0xff]
    %v323 = vld [vmem:[%s14 + $0x138] sm:$0xff]
    %v324 = vld [vmem:[%s15] sm:$0x3]
    %v326 = vlaneseq
    %v327 = vshrl.u32 %v326, 7
    %v328 = vsub.s32 0, %v327
    %v329 = vrot.slane %v324, %v328
    %v330 = vlaneseq
    %v331 = vshrl.u32 %v330, 7
    %v332 = vsub.s32 1, %v331
    %v333 = vrot.slane %v324, %v332
    %v336 = vsel %vm263, %v223, 0
    %v338 = vsel %vm263, %v280, 0
    %340 = vmatprep.subr.mxu0 %v315
    %341 = vmatpush1.msra.mxu0 %v314
    %342 = vmatprep.subr.mxu0 %v313
    %343 = vmatpush1.msra.mxu0 %v312
    %344 = vmatprep.subr.mxu0 %v311
    %345 = vmatpush1.msra.mxu0 %v310
    %346 = vmatprep.subr.mxu0 %v309
    %347 = vmatpush1.msra.mxu0 %v308
    %348 = vmatprep.subr.mxu0 %v307
    %349 = vmatpush1.msra.mxu0 %v306
    %350 = vmatprep.subr.mxu0 %v305
    %351 = vmatpush1.msra.mxu0 %v304
    %352 = vmatprep.subr.mxu0 %v303
    %353 = vmatpush1.msra.mxu0 %v302
    %354 = vmatprep.subr.mxu0 %v301
    %355 = vmatpush1.msra.mxu0 %v300
    %356 = vmatprep.subr.mxu0 %v299
    %357 = vmatpush1.msra.mxu0 %v298
    %358 = vmatprep.subr.mxu0 %v297
    %359 = vmatpush1.msra.mxu0 %v296
    %360 = vmatprep.subr.mxu0 %v295
    %361 = vmatpush1.msra.mxu0 %v294
    %362 = vmatprep.subr.mxu0 %v293
    %363 = vmatpush1.msra.mxu0 %v292
    %364 = vmatprep.subr.mxu0 %v291
    %365 = vmatpush1.msra.mxu0 %v290
    %366 = vmatprep.subr.mxu0 %v289
    %367 = vmatpush1.msra.mxu0 %v288
    %368 = vmatprep.subr.mxu0 %v287
    %369 = vmatpush1.msra.mxu0 %v286
    %370 = vmatprep.subr.mxu0 %v285
    %371 = vmatpush1.msra.mxu0 %v284
    %372 = vmatprep.subr.mxu0 0.0
    %373 = vmatpush2.msra.mxu0 0.0
    %374 = vmatprep.subr.mxu0 0.0
    %375 = vmatpush2.msra.mxu0 0.0
    %376 = vmatprep.subr.mxu0 0.0
    %377 = vmatpush2.msra.mxu0 0.0
    %378 = vmatprep.subr.mxu0 0.0
    %379 = vmatpush2.msra.mxu0 0.0
    %380 = vmatprep.subr.mxu0 0.0
    %381 = vmatpush2.msra.mxu0 0.0
    %382 = vmatprep.subr.mxu0 0.0
    %383 = vmatpush2.msra.mxu0 0.0
    %384 = vmatprep.subr.mxu0 0.0
    %385 = vmatpush2.msra.mxu0 0.0
    %386 = vmatprep.subr.mxu0 0.0
    %387 = vmatpush2.msra.mxu0 0.0
    %388 = vmatprep.subr.mxu0 0.0
    %389 = vmatpush2.msra.mxu0 0.0
    %390 = vmatprep.subr.mxu0 0.0
    %391 = vmatpush2.msra.mxu0 0.0
    %392 = vmatprep.subr.mxu0 0.0
    %393 = vmatpush2.msra.mxu0 0.0
    %394 = vmatprep.subr.mxu0 0.0
    %395 = vmatpush2.msra.mxu0 0.0
    %396 = vmatprep.subr.mxu0 %v323
    %397 = vmatpush2.msra.mxu0 %v322
    %398 = vmatprep.subr.mxu0 %v321
    %399 = vmatpush2.msra.mxu0 %v320
    %400 = vmatprep.subr.mxu0 %v319
    %401 = vmatpush2.msra.mxu0 %v318
    %402 = vmatprep.subr.mxu0 %v317
    %403 = vmatpush2.msra.mxu0 %v316
    %404 = vmatprep.mubr.f32.mxu0 %v336
    %405 = vmatmul.mubr.f32.gmra.mxu0 %v267
    %v406 = vpop.f32.mrf.mxu0
    %v407 = vadd.f32 %v329, %v406
    %v408 = vpop.f32.mrf.mxu0
    %v409 = vadd.f32 %v333, %v408
    %410 = vmatprep.mubr.f32.mxu0 %v338
    %411 = vmatmul.mubr.f32.gmra.mxu0 %v283
    %v412 = vpop.f32.mrf.mxu0
    %v413 = vadd.f32 %v329, %v412
    %v414 = vpop.f32.mrf.mxu0
    %v415 = vadd.f32 %v333, %v414
    %416 = vdwg.mxu0
    %v417 = vmax.f32 %v407, 0.0
    %v418 = vmax.f32 %v409, 0.0
    %v419 = vmax.f32 %v413, 0.0
    %v420 = vmax.f32 %v415, 0.0
    %v421 = vld [vmem:[%s16] sm:$0xff]
    %v422 = vld [vmem:[%s16 + $0x8] sm:$0xff]
    %v423 = vld [vmem:[%s16 + $0x10] sm:$0xff]
    %v424 = vld [vmem:[%s16 + $0x18] sm:$0xff]
    %v425 = vld [vmem:[%s16 + $0x20] sm:$0xff]
    %v426 = vld [vmem:[%s16 + $0x28] sm:$0xff]
    %v427 = vld [vmem:[%s16 + $0x30] sm:$0xff]
    %v428 = vld [vmem:[%s16 + $0x38] sm:$0xff]
    %v429 = vld [vmem:[%s16 + $0x40] sm:$0xff]
    %v430 = vld [vmem:[%s16 + $0x48] sm:$0xff]
    %v431 = vld [vmem:[%s16 + $0x50] sm:$0xff]
    %v432 = vld [vmem:[%s16 + $0x58] sm:$0xff]
    %v433 = vld [vmem:[%s16 + $0x60] sm:$0xff]
    %v434 = vld [vmem:[%s16 + $0x68] sm:$0xff]
    %v435 = vld [vmem:[%s16 + $0x70] sm:$0xff]
    %v436 = vld [vmem:[%s16 + $0x78] sm:$0xff]
    %v437 = vld [vmem:[%s16 + $0x80] sm:$0xff]
    %v438 = vld [vmem:[%s16 + $0x88] sm:$0xff]
    %v439 = vld [vmem:[%s16 + $0x90] sm:$0xff]
    %v440 = vld [vmem:[%s16 + $0x98] sm:$0xff]
    %v441 = vld [vmem:[%s16 + $0xa0] sm:$0xff]
    %v442 = vld [vmem:[%s16 + $0xa8] sm:$0xff]
    %v443 = vld [vmem:[%s16 + $0xb0] sm:$0xff]
    %v444 = vld [vmem:[%s16 + $0xb8] sm:$0xff]
    %v445 = vld [vmem:[%s16 + $0xc0] sm:$0xff]
    %v446 = vld [vmem:[%s17] sm:$0x1]
    %v448 = vlaneseq
    %v449 = vshrl.u32 %v448, 7
    %v450 = vsub.s32 0, %v449
    %v451 = vrot.slane %v446, %v450
    %vm453 = vcmask 588800
    %v455 = vsel %vm453, %v418, 0
    %v458 = vsel %vm453, %v420, 0
    %460 = vmatprep.subr.mxu0 0.0
    %461 = vmatpush1.msra.mxu0 %v436
    %462 = vmatprep.subr.mxu0 0.0
    %463 = vmatpush1.msra.mxu0 %v435
    %464 = vmatprep.subr.mxu0 0.0
    %465 = vmatpush1.msra.mxu0 %v434
    %466 = vmatprep.subr.mxu0 0.0
    %467 = vmatpush1.msra.mxu0 %v433
    %468 = vmatprep.subr.mxu0 0.0
    %469 = vmatpush1.msra.mxu0 %v432
    %470 = vmatprep.subr.mxu0 0.0
    %471 = vmatpush1.msra.mxu0 %v431
    %472 = vmatprep.subr.mxu0 0.0
    %473 = vmatpush1.msra.mxu0 %v430
    %474 = vmatprep.subr.mxu0 0.0
    %475 = vmatpush1.msra.mxu0 %v429
    %476 = vmatprep.subr.mxu0 0.0
    %477 = vmatpush1.msra.mxu0 %v428
    %478 = vmatprep.subr.mxu0 0.0
    %479 = vmatpush1.msra.mxu0 %v427
    %480 = vmatprep.subr.mxu0 0.0
    %481 = vmatpush1.msra.mxu0 %v426
    %482 = vmatprep.subr.mxu0 0.0
    %483 = vmatpush1.msra.mxu0 %v425
    %484 = vmatprep.subr.mxu0 0.0
    %485 = vmatpush1.msra.mxu0 %v424
    %486 = vmatprep.subr.mxu0 0.0
    %487 = vmatpush1.msra.mxu0 %v423
    %488 = vmatprep.subr.mxu0 0.0
    %489 = vmatpush1.msra.mxu0 %v422
    %490 = vmatprep.subr.mxu0 0.0
    %491 = vmatpush1.msra.mxu0 %v421
    %492 = vmatprep.subr.mxu0 0.0
    %493 = vmatpush2.msra.mxu0 0.0
    %494 = vmatprep.subr.mxu0 0.0
    %495 = vmatpush2.msra.mxu0 0.0
    %496 = vmatprep.subr.mxu0 0.0
    %497 = vmatpush2.msra.mxu0 0.0
    %498 = vmatprep.subr.mxu0 0.0
    %499 = vmatpush2.msra.mxu0 0.0
    %500 = vmatprep.subr.mxu0 0.0
    %501 = vmatpush2.msra.mxu0 0.0
    %502 = vmatprep.subr.mxu0 0.0
    %503 = vmatpush2.msra.mxu0 0.0
    %504 = vmatprep.subr.mxu0 0.0
    %505 = vmatpush2.msra.mxu0 0.0
    %506 = vmatprep.subr.mxu0 0.0
    %507 = vmatpush2.msra.mxu0 %v445
    %508 = vmatprep.subr.mxu0 0.0
    %509 = vmatpush2.msra.mxu0 %v444
    %510 = vmatprep.subr.mxu0 0.0
    %511 = vmatpush2.msra.mxu0 %v443
    %512 = vmatprep.subr.mxu0 0.0
    %513 = vmatpush2.msra.mxu0 %v442
    %514 = vmatprep.subr.mxu0 0.0
    %515 = vmatpush2.msra.mxu0 %v441
    %516 = vmatprep.subr.mxu0 0.0
    %517 = vmatpush2.msra.mxu0 %v440
    %518 = vmatprep.subr.mxu0 0.0
    %519 = vmatpush2.msra.mxu0 %v439
    %520 = vmatprep.subr.mxu0 0.0
    %521 = vmatpush2.msra.mxu0 %v438
    %522 = vmatprep.subr.mxu0 0.0
    %523 = vmatpush2.msra.mxu0 %v437
    %524 = vmatprep.mubr.f32.mxu0 %v455
    %525 = vmatmul.mubr.f32.gmra.mxu0 %v417
    %v526 = vpop.f32.mrf.mxu0
    %v527 = vadd.f32 %v451, %v526
    %v528 = vpop.f32.mrf.mxu0
    %529 = vmatprep.mubr.f32.mxu0 %v458
    %530 = vmatmul.mubr.f32.gmra.mxu0 %v419
    %v531 = vpop.f32.mrf.mxu0
    %v532 = vadd.f32 %v451, %v531
    %v533 = vpop.f32.mrf.mxu0
    %534 = vdwg.mxu0
    %v535 = vmul.f32 %v202, %v209
    %537 = vrot.lane.b32.xlu0 %v535, 96
    %v538 = vpop.permute.xlu0 %537
    %v540 = vsub.f32 %v535, %v538
    %542 = vrot.lane.b32.xlu0 %v209, 96
    %v543 = vpop.permute.xlu0 %542
    %v545 = vmul.f32 %v202, %v543
    %546 = vrot.lane.b32.xlu0 %v209, 32
    %v547 = vpop.permute.xlu0 %546
    %v549 = vmul.f32 %v202, %v547
    %551 = vrot.lane.b32.xlu0 %v549, 96
    %v552 = vpop.permute.xlu0 %551
    %v554 = vadd.f32 %v545, %v552
    %v555 = vmul.f32 %v540, %v79
    %557 = vrot.lane.b32.xlu0 %v79, 96
    %v558 = vpop.permute.xlu0 %557
    %v560 = vmul.f32 %v554, %v558
    %v561 = vadd.f32 %v555, %v560
    %v562 = vsel %vm263, %v561, 0.0
    %563 = vadd.xlane.f32.xlu0 %v562
    %v564 = vpop.xlane.xlu0 %563
    %566 = vrot.lane.b32.xlu0 %v554, 32
    %v567 = vpop.permute.xlu0 %566
    %v569 = vsel %vm263, %v540, %v567
    %v570 = vmul.f32 %v564, %v79
    %v571 = vsub.f32 %v569, %v570
    %v572 = vmul.f32 %v202, %v527
    %574 = vrot.lane.b32.xlu0 %v532, 32
    %v575 = vpop.permute.xlu0 %574
    %v577 = vmul.f32 %v202, %v575
    %579 = vrot.lane.b32.xlu0 %v577, 96
    %v580 = vpop.permute.xlu0 %579
    %v582 = vsub.f32 %v572, %v580
    %v583 = vmul.f32 %v202, %v532
    %585 = vrot.lane.b32.xlu0 %v527, 32
    %v586 = vpop.permute.xlu0 %585
    %v588 = vmul.f32 %v202, %v586
    %590 = vrot.lane.b32.xlu0 %v588, 96
    %v591 = vpop.permute.xlu0 %590
    %v593 = vadd.f32 %v583, %v591
    %v594 = vmul.f32 %v582, %v79
    %v595 = vmul.f32 %v593, %v558
    %v596 = vadd.f32 %v594, %v595
    %v597 = vsel %vm263, %v596, 0.0
    %598 = vadd.xlane.f32.xlu0 %v597
    %v599 = vpop.xlane.xlu0 %598
    %601 = vrot.lane.b32.xlu0 %v593, 32
    %v602 = vpop.permute.xlu0 %601
    %v604 = vsel %vm263, %v582, %v602
    %v605 = vmul.f32 %v599, %v79
    %v606 = vsub.f32 %v604, %v605
    %608 = vrot.lane.b32.xlu0 %v606, 64
    %v609 = vpop.permute.xlu0 %608
    %v611 = vsel %vm66, %v571, %v609
    %612 = vst [vmem:[%s18] sm:$0xff] %v611
    %v613 = vld [vmem:[%s12] sm:$0xff]
    %v614 = vmul.f32 %v613, %v613
    %v615 = vsel %vm66, %v614, 0.0
    %616 = vadd.xlane.f32.xlu0 %v615
    %v617 = vpop.xlane.xlu0 %616
    %v618 = vrsqrt.pop %v617
    %v619 = vmul.f32 %v617, %v618
    %vm620 = vcmp.eq.f32.partialorder %v617, inf
    %v621 = vsel %vm620, %v617, %v619
    %vm622 = vcmp.eq.f32.partialorder %v617, 0.0
    %v623 = vand.u32 %v617, 2147483648
    %v624 = vsel %vm622, %v623, %v621
    %v625 = vmax.f32 %v624, 1e-12
    %v626 = vrcp.pop %v625
    %v627 = vmul.f32 %v613, %v626
    %v628 = vld [vmem:[%s13] sm:$0xff]
    %v629 = vmul.f32 %v627, %v628
    %631 = vrot.lane.b32.xlu0 %v629, 96
    %v632 = vpop.permute.xlu0 %631
    %v634 = vsub.f32 %v629, %v632
    %636 = vrot.lane.b32.xlu0 %v628, 32
    %v637 = vpop.permute.xlu0 %636
    %v639 = vmul.f32 %v627, %v637
    %640 = vrot.lane.b32.xlu0 %v628, 96
    %v641 = vpop.permute.xlu0 %640
    %v643 = vmul.f32 %v627, %v641
    %645 = vrot.lane.b32.xlu0 %v643, 32
    %v646 = vpop.permute.xlu0 %645
    %v648 = vadd.f32 %v639, %v646
    %v649 = vsel %vm263, %v634, %v648
    %650 = vst.msk [vmem:[%s19] sm:$0xff] %vm66, %v649
    %v651 = vmul.f32 %v202, %v202
    %653 = vrot.lane.b32.xlu0 %v651, 96
    %v654 = vpop.permute.xlu0 %653
    %v656 = vadd.f32 %v651, %v654
    %v657 = vrsqrt.pop %v656
    %v658 = vmul.f32 %v656, %v657
    %vm659 = vcmp.eq.f32.partialorder %v656, inf
    %v660 = vsel %vm659, %v656, %v658
    %vm661 = vcmp.eq.f32.partialorder %v656, 0.0
    %v662 = vand.u32 %v656, 2147483648
    %v663 = vsel %vm661, %v662, %v660
    %v664 = vmul.f32 %v209, %v209
    %666 = vrot.lane.b32.xlu0 %v664, 96
    %v667 = vpop.permute.xlu0 %666
    %v669 = vadd.f32 %v664, %v667
    %v670 = vrsqrt.pop %v669
    %v671 = vmul.f32 %v669, %v670
    %vm672 = vcmp.eq.f32.partialorder %v669, inf
    %v673 = vsel %vm672, %v669, %v671
    %vm674 = vcmp.eq.f32.partialorder %v669, 0.0
    %v675 = vand.u32 %v669, 2147483648
    %v676 = vsel %vm674, %v675, %v673
    %v677 = vmul.f32 %v230, %v230
    %679 = vrot.lane.b32.xlu0 %v677, 96
    %v680 = vpop.permute.xlu0 %679
    %v682 = vadd.f32 %v677, %v680
    %v683 = vrsqrt.pop %v682
    %v684 = vmul.f32 %v682, %v683
    %vm685 = vcmp.eq.f32.partialorder %v682, inf
    %v686 = vsel %vm685, %v682, %v684
    %vm687 = vcmp.eq.f32.partialorder %v682, 0.0
    %v688 = vand.u32 %v682, 2147483648
    %v689 = vsel %vm687, %v688, %v686
    %v690 = vmul.f32 %v223, %v223
    %692 = vrot.lane.b32.xlu0 %v690, 96
    %v693 = vpop.permute.xlu0 %692
    %v695 = vadd.f32 %v690, %v693
    %v696 = vrsqrt.pop %v695
    %v697 = vmul.f32 %v695, %v696
    %vm698 = vcmp.eq.f32.partialorder %v695, inf
    %v699 = vsel %vm698, %v695, %v697
    %vm700 = vcmp.eq.f32.partialorder %v695, 0.0
    %v701 = vand.u32 %v695, 2147483648
    %v702 = vsel %vm700, %v701, %v699
    %v703 = vmul.f32 %v216, %v216
    %705 = vrot.lane.b32.xlu0 %v703, 96
    %v706 = vpop.permute.xlu0 %705
    %v708 = vadd.f32 %v703, %v706
    %v709 = vrsqrt.pop %v708
    %v710 = vmul.f32 %v708, %v709
    %vm711 = vcmp.eq.f32.partialorder %v708, inf
    %v712 = vsel %vm711, %v708, %v710
    %vm713 = vcmp.eq.f32.partialorder %v708, 0.0
    %v714 = vand.u32 %v708, 2147483648
    %v715 = vsel %vm713, %v714, %v712
    %v716 = vmul.f32 %v236, %v236
    %718 = vrot.lane.b32.xlu0 %v716, 96
    %v719 = vpop.permute.xlu0 %718
    %v721 = vadd.f32 %v716, %v719
    %v722 = vrsqrt.pop %v721
    %v723 = vmul.f32 %v721, %v722
    %vm724 = vcmp.eq.f32.partialorder %v721, inf
    %v725 = vsel %vm724, %v721, %v723
    %vm726 = vcmp.eq.f32.partialorder %v721, 0.0
    %v727 = vand.u32 %v721, 2147483648
    %v728 = vsel %vm726, %v727, %v725
    %v729 = vmul.f32 %v243, %v243
    %731 = vrot.lane.b32.xlu0 %v729, 96
    %v732 = vpop.permute.xlu0 %731
    %v734 = vadd.f32 %v729, %v732
    %v735 = vrsqrt.pop %v734
    %v736 = vmul.f32 %v734, %v735
    %vm737 = vcmp.eq.f32.partialorder %v734, inf
    %v738 = vsel %vm737, %v734, %v736
    %vm739 = vcmp.eq.f32.partialorder %v734, 0.0
    %v740 = vand.u32 %v734, 2147483648
    %v741 = vsel %vm739, %v740, %v738
    %v742 = vmul.f32 %v250, %v250
    %744 = vrot.lane.b32.xlu0 %v742, 96
    %v745 = vpop.permute.xlu0 %744
    %v747 = vadd.f32 %v742, %v745
    %v748 = vrsqrt.pop %v747
    %v749 = vmul.f32 %v747, %v748
    %vm750 = vcmp.eq.f32.partialorder %v747, inf
    %v751 = vsel %vm750, %v747, %v749
    %vm752 = vcmp.eq.f32.partialorder %v747, 0.0
    %v753 = vand.u32 %v747, 2147483648
    %v754 = vsel %vm752, %v753, %v751
    %756 = vrot.lane.b32.xlu0 %v676, 32
    %v757 = vpop.permute.xlu0 %756
    %760 = vrot.lane.b32.xlu0 %v689, 64
    %v761 = vpop.permute.xlu0 %760
    %764 = vrot.lane.b32.xlu0 %v702, 96
    %v765 = vpop.permute.xlu0 %764
    %768 = vrot.lane.b32.xlu0 %v728, 32
    %v769 = vpop.permute.xlu0 %768
    %772 = vrot.lane.b32.xlu0 %v741, 64
    %v773 = vpop.permute.xlu0 %772
    %776 = vrot.lane.b32.xlu0 %v754, 96
    %v777 = vpop.permute.xlu0 %776
    %v779 = vsel %vm263, %v663, %v757
    %v780 = vsel %vm66, %v779, %v761
    %v781 = vsel %vm266, %v780, %v765
    %v782 = vsel %vm263, %v715, %v769
    %v783 = vsel %vm66, %v782, %v773
    %v784 = vsel %vm266, %v783, %v777
    %785 = vst [vmem:[%s20] sm:$0xff] %v781
    %786 = vst [vmem:[%s20 + $0x8] sm:$0xff] %v784
    %v787 = vsub.f32 %v527, %v209
    %v788 = vsub.f32 %v532, %v543
    %v789 = vmul.f32 %v787, %v787
    %v790 = vmul.f32 %v788, %v788
    %v791 = vadd.f32 %v789, %v790
    %v792 = vrsqrt.pop %v791
    %v793 = vmul.f32 %v791, %v792
    %vm794 = vcmp.eq.f32.partialorder %v791, inf
    %v795 = vsel %vm794, %v791, %v793
    %vm796 = vcmp.eq.f32.partialorder %v791, 0.0
    %v797 = vand.u32 %v791, 2147483648
    %v798 = vsel %vm796, %v797, %v795
    %v799 = vsel %vm263, %v798, 0.0
    %800 = vadd.xlane.f32.xlu0 %v799
    %v801 = vpop.xlane.xlu0 %800
    %v802 = vrot.slane %v801, 4
    %v803 = vadd.f32 %v801, %v802
    %v804 = vrot.slane %v803, 2
    %v805 = vadd.f32 %v803, %v804
    %v806 = vrot.slane %v805, 1
    %v807 = vadd.f32 %v805, %v806
    %v808 = vmul.f32 %v807, 0.5
    %vm809 = vcmask 0
    %810 = vst.msk [vmem:[#allocation2] sm:$0x1] %vm809, %v808
    // Predicated region
    $region74: #{forward.3} parent=1 // pred_check
      _
    $region75: #{forward.3} parent=1 // pred_check_branch
      %812 = sbr.rel (0) target = $region77
    $region76: #{forward.3} parent=1 // pred_region
      _
    $region77: #{forward.3} parent=1 // pred_fallthru
      _
    // Predicated region
    $region78: #{forward.3} parent=1 // pred_check
      _
    $region79: #{forward.3} parent=1 // pred_check_branch
      %814 = sbr.rel (0) target = $region81
    $region80: #{forward.3} parent=1 // pred_region
      _
    $region81: #{forward.3} parent=1 // pred_fallthru
      _
    // Predicated region
    $region82: #{forward.3} parent=1 // pred_check
      _
    $region83: #{forward.3} parent=1 // pred_check_branch
      %816 = sbr.rel (0) target = $region85
    $region84: #{forward.3} parent=1 // pred_region
      _
    $region85: #{forward.3} parent=1 // pred_fallthru
      _
    // Predicated region
    $region86: #{forward.3} parent=1 // pred_check
      _
    $region87: #{forward.3} parent=1 // pred_check_branch
      %818 = sbr.rel (0) target = $region89
    $region88: #{forward.3} parent=1 // pred_region
      %s820 = ssub.s32 16, 16
      %821 = vsyncadd [#allocation3], %s820
      %s823 = sshll.u32 [#allocation2], 4
      %s824 = int_to_ptr.vmem [resolvable:$true] %s823
      %826 = dma.vmem_to_hbm [thread:$0]  %s824, 16, %s21, [#allocation3]
    $region89: #{forward.3} parent=1 // pred_fallthru
      _
    // Predicated region
    $region90: #{forward.3} parent=1 // pred_check
      _
    $region91: #{forward.3} parent=1 // pred_check_branch
      %828 = sbr.rel (0) target = $region93
    $region92: #{forward.3} parent=1 // pred_region
      _
    $region93: #{forward.3} parent=1 // pred_fallthru
      _
    // Predicated region
    $region94: #{forward.3} parent=1 // pred_check
      _
    $region95: #{forward.3} parent=1 // pred_check_branch
      %830 = sbr.rel (0) target = $region97
    $region96: #{forward.3} parent=1 // pred_region
      _
    $region97: #{forward.3} parent=1 // pred_fallthru
      _
    // Predicated region
    $region98: #{forward.3} parent=1 // pred_check
      _
    $region99: #{forward.3} parent=1 // pred_check_branch
      %832 = sbr.rel (0) target = $region101
    $region100: #{forward.3} parent=1 // pred_region
      _
    $region101: #{forward.3} parent=1 // pred_fallthru
      _
    // Predicated region
    $region102: #{forward.3} parent=1 // pred_check
      _
    $region103: #{forward.3} parent=1 // pred_check_branch
      %834 = sbr.rel (0) target = $region105
    $region104: #{forward.3} parent=1 // pred_region
      %835 = dma.done [#allocation3], 16
    $region105: #{forward.3} parent=1 // pred_fallthru
      _
    %836 = vsyncpa [#allocation3], 1

</llo_original>
